<compile_context>
chip_gen: v6e
topology: v6e:2x2x1
jax: 0.10.0
libtpu: 0.0.40
codegen_flags: <defaults>
</compile_context>

<pallas_src>
import jax
import jax.numpy as jnp
from jax import lax
from jax.experimental import pallas as pl
from jax.experimental.pallas import tpu as pltpu


# ---------------------------------------------------------------------------
# Path A: small table -> VMEM-resident table, one-hot MXU gather.
# ---------------------------------------------------------------------------
def _small_table_kernel(ids_ref, keep_ref, table_ref, pos_ref, out_ref):
    # ids_ref  : (Ts, 1) int32   token ids for this tile (clamped in wrapper)
    # keep_ref : (Ts, 1) float   1.0 keep / 0.0 zero  (masked_fill polarity)
    # table_ref: (V, D)  float   full table, VMEM resident (loaded once)
    # pos_ref  : (Ts, D) float   positional-embedding tile (reused across batch)
    # out_ref  : (1, Ts, D)
    V = table_ref.shape[0]
    Ts = out_ref.shape[1]
    ids = ids_ref[...]                                            # (Ts, 1)
    iota = lax.broadcasted_iota(jnp.int32, (Ts, V), 1)
    onehot = (iota == ids).astype(table_ref.dtype)                # exact row select
    emb = jnp.dot(onehot, table_ref[...], preferred_element_type=jnp.float32)
    emb = (emb + pos_ref[...]) * keep_ref[...]
    # TODO(synk): training-mode dropout (random mask + 1/(1-p) scale) not implemented.
    out_ref[0] = emb.astype(out_ref.dtype)


def _embedding_small_table(ids2, keep2, table, pos2, B, S, D, Ts):
    nst = S // Ts
    return pl.pallas_call(
        _small_table_kernel,
        out_shape=jax.ShapeDtypeStruct((B, S, D), table.dtype),
        grid_spec=pltpu.PrefetchScalarGridSpec(
            num_scalar_prefetch=0,
            grid=(nst, B),                          # token tile outer, batch inner
            in_specs=[
                pl.BlockSpec((Ts, 1), lambda j, b: (b * nst + j, 0)),   # ids
                pl.BlockSpec((Ts, 1), lambda j, b: (b * nst + j, 0)),   # keep
                pl.BlockSpec(table.shape, lambda j, b: (0, 0)),         # table: DMA'd once
                pl.BlockSpec((Ts, D), lambda j, b: (j, 0)),             # pos: reused over b
            ],
            out_specs=pl.BlockSpec((1, Ts, D), lambda j, b: (b, j, 0)),
        ),
        compiler_params=pltpu.CompilerParams(
            dimension_semantics=("parallel", "parallel"),
        ),
    )(ids2, keep2, table, pos2)


# ---------------------------------------------------------------------------
# Path B: large table -> HBM-resident table, DMA row gathers (double-buffered).
# ---------------------------------------------------------------------------
def _gather_kernel(ids_ref, keep_ref, table_ref, pos_ref, out_ref, gbuf, sem):
    # ids_ref  : (B*S,) int32 in SMEM (scalar prefetch), clamped in the wrapper
    # keep_ref : (Ts, 1) float
    # table_ref: (V, D)  float in HBM (pl.ANY)
    # pos_ref  : (Ts, D) float
    # out_ref  : (1, Ts, D)
    # gbuf     : (2, Ts, D) VMEM double-buffered gather landing buffer
    # sem      : (2,) DMA semaphores, one per slot
    j = pl.program_id(0)                   # token tile (outer)
    b = pl.program_id(1)                   # batch (inner)
    nst = pl.num_programs(0)
    nb = pl.num_programs(1)
    Ts = out_ref.shape[1]

    t = j * nb + b                         # flat sequential step index
    slot = lax.rem(t, 2)

    def issue_gather(tile_j, tile_b, slot_):
        base = (tile_b * nst + tile_j) * Ts

        def body(i, carry):
            row = ids_ref[base + i]        # already clamped -> no OOB DMA
            pltpu.make_async_copy(
                table_ref.at[pl.ds(row, 1), :],
                gbuf.at[slot_, pl.ds(i, 1), :],
                sem.at[slot_],
            ).start()
            return carry

        # Unrolled so the SMEM id load / address math / descriptor push co-issue
        # across the scalar + vector-misc slots instead of paying rolled-loop
        # branch overhead per row.
        lax.fori_loop(0, Ts, body, 0, unroll=8)

    # Prime the pipeline only at the very first grid step.
    @pl.when(t == 0)
    def _():
        issue_gather(j, b, slot)

    # Cross-boundary lookahead: prefetch the NEXT grid step's tile (if any) into
    # the other slot so its row DMAs overlap this step's wait + compute.
    @pl.when(t + 1 < nst * nb)
    def _():
        nxt_b = lax.rem(b + 1, nb)
        nxt_j = j + jnp.where(b + 1 == nb, 1, 0)
        issue_gather(nxt_j, nxt_b, 1 - slot)

    # Single combined wait: DMA semaphores are byte-counted, so one (Ts, D)
    # descriptor consumes exactly the Ts (1, D) row copies issued for this slot.
    pltpu.make_async_copy(
        table_ref.at[pl.ds(0, Ts), :],
        gbuf.at[slot],
        sem.at[slot],
    ).wait()

    emb = (gbuf[slot] + pos_ref[...]) * keep_ref[...]
    # TODO(synk): training-mode dropout not implemented (eval semantics only).
    out_ref[0] = emb.astype(out_ref.dtype)


def _embedding_hbm_gather(ids_flat, keep2, table, pos2, B, S, D, Ts):
    V = table.shape[0]
    nst = S // Ts
    assert Ts <= V, "token tile larger than vocab; use the small-table path"
    # ids are scalar-prefetched into SMEM (1-D SMEM pads to next pow2 bytes);
    # guard against silent over-allocation at production B*S.
    assert B * S <= (1 << 17), (
        "ids scalar-prefetch too large for SMEM; block the ids input instead")
    return pl.pallas_call(
        _gather_kernel,
        out_shape=jax.ShapeDtypeStruct((B, S, D), table.dtype),
        grid_spec=pltpu.PrefetchScalarGridSpec(
            num_scalar_prefetch=1,               # token ids -> SMEM
            grid=(nst, B),                       # token tile outer, batch inner
            in_specs=[
                pl.BlockSpec((Ts, 1), lambda j, b, ids: (b * nst + j, 0)),  # keep
                pl.BlockSpec(memory_space=pl.ANY),                          # table in HBM
                pl.BlockSpec((Ts, D), lambda j, b, ids: (j, 0)),            # pos: reused over b
            ],
            out_specs=pl.BlockSpec((1, Ts, D), lambda j, b, ids: (b, j, 0)),
            scratch_shapes=[
                pltpu.VMEM((2, Ts, D), table.dtype),       # double-buffered landing
                pltpu.SemaphoreType.DMA((2,)),
            ],
        ),
        # The double-buffer / cross-boundary-prefetch state spans the whole grid,
        # so both axes must execute sequentially ("arbitrary").
        # TODO(synk): explicit v7x megacore split of the token-tile axis while
        # keeping the carried double-buffer state inside each core's sub-range.
        compiler_params=pltpu.CompilerParams(
            dimension_semantics=("arbitrary", "arbitrary"),
        ),
    )(ids_flat, keep2, table, pos2)


# ---------------------------------------------------------------------------
# Tile choice + dispatch wrapper.
# ---------------------------------------------------------------------------
def _choose_token_tile(S, D, itemsize, vmem_budget_bytes=8 << 20):
    """Largest Ts (multiple of 8, divisor of S, <= 1024) whose per-tile VMEM
    footprint (~6*Ts*D*itemsize for double-buffered scratch + out + pos blocks)
    fits the budget.  Conservative vs the 32 MiB default scoped VMEM on all
    generations (and v7x's 64 MiB physical VMEM)."""
    assert S % 8 == 0, "sequence length must be a multiple of 8"
    best = 8
    for ts in range(8, min(S, 1024) + 1, 8):
        if S % ts == 0 and 6 * ts * D * itemsize <= vmem_budget_bytes:
            best = ts
    return best


def gpt_embedding(inputs, masks, token_table, pos_embedding, *,
                  token_tile=None, force_gather=False,
                  vmem_table_budget_bytes=8 << 20):
    """Forward pass of GPTEmbedding (eval mode).

    inputs        : (B, S) int    token ids
    masks         : (B, S) int    positions where mask != 0 are zero-filled
                                  (exact masked_fill semantics of the module)
    token_table   : (V, D) float  (padding_idx row pre-zeroed, like nn.Embedding)
    pos_embedding : (1, S, D) float  (or (S, D))
    returns       : (B, S, D) float
    """
    B, S = inputs.shape
    V, D = token_table.shape
    assert D % 128 == 0, "embed_dim should be a multiple of 128 (TPU lane width)"
    itemsize = token_table.dtype.itemsize

    Ts = token_tile if token_tile is not None else _choose_token_tile(S, D, itemsize)
    assert S % Ts == 0 and Ts % 8 == 0

    # Clamp hoisted out of the kernel (nn.Embedding would raise on OOB ids; here
    # they are clamped in the wrapper so no OOB DMA / gather can occur).
    ids_flat = jnp.clip(inputs.reshape(B * S).astype(jnp.int32), 0, V - 1)
    # masked_fill(masks.unsqueeze(-1), 0): keep where mask == 0, zero elsewhere.
    keep2 = (masks.reshape(B * S, 1) == 0).astype(token_table.dtype)
    pos2 = pos_embedding.reshape(S, D)

    table_bytes = V * D * itemsize
    use_small = (
        not force_gather
        and table_bytes <= vmem_table_budget_bytes     # table fits VMEM comfortably
        and Ts * V * itemsize <= (2 << 20)             # one-hot tile stays small
    )
    if use_small:
        ids2 = ids_flat.reshape(B * S, 1)
        return _embedding_small_table(ids2, keep2, token_table, pos2, B, S, D, Ts)
    return _embedding_hbm_gather(ids_flat, keep2, token_table, pos2, B, S, D, Ts)


if __name__ == "__main__":
    # Small config consistent with the module's __init__ (TPU-friendly sizes:
    # D multiple of 128, S multiple of the token tile).
    batch = 2
    vocab_size = 512
    max_seq_len = 256        # S must equal max_seq_len (pos_embedding broadcast)
    embed_dim = 128
    pad_idx = 0

    key = jax.random.PRNGKey(0)
    k_tok, k_pos, k_ids = jax.random.split(key, 3)

    # nn.Embedding ~ N(0,1) with the padding_idx row zeroed; pos ~ torch.randn.
    token_table = jax.random.normal(k_tok, (vocab_size, embed_dim), dtype=jnp.float32)
    token_table = token_table.at[pad_idx].set(0.0)
    pos_embedding = jax.random.normal(k_pos, (1, max_seq_len, embed_dim), dtype=jnp.float32)

    # Token ids; mask is nonzero where masked_fill should zero the embedding
    # (exactly the module's masked_fill(masks, 0) polarity).
    inputs = jax.random.randint(k_ids, (batch, max_seq_len), 0, vocab_size, dtype=jnp.int32)
    inputs = inputs.at[1, -3:].set(pad_idx)
    masks = jnp.zeros((batch, max_seq_len), dtype=jnp.int32)
    masks = masks.at[1, -3:].set(1)

    # Pure-JAX reference.
    ref = jnp.take(token_table, inputs, axis=0) + pos_embedding
    ref = jnp.where(masks[..., None] != 0, 0.0, ref)

    # Path A: small table (auto-selected) -> VMEM-resident one-hot MXU gather.
    out_small = jax.block_until_ready(
        gpt_embedding(inputs, masks, token_table, pos_embedding))
    assert out_small.shape == (batch, max_seq_len, embed_dim)
    assert jnp.allclose(out_small, ref, atol=1e-5), "small-table path mismatch"

    # Path B: HBM gather path (forced, with Ts=128 so the grid has multiple
    # token tiles and the cross-boundary prefetch / double buffering are hit).
    out_gather = jax.block_until_ready(
        gpt_embedding(inputs, masks, token_table, pos_embedding,
                      force_gather=True, token_tile=128))
    assert jnp.allclose(out_gather, ref, atol=1e-5), "gather path mismatch"

    print("KERNEL_OK")
</pallas_src>

<mosaic_0001>
module attributes {stable_mosaic.version = 11 : i64} {
  func.func @_small_table_kernel(%arg0: i32, %arg1: i32, %arg2: memref<256x1xi32, #tpu.memory_space<vmem>>, %arg3: memref<256x1xf32, #tpu.memory_space<vmem>>, %arg4: memref<512x128xf32, #tpu.memory_space<vmem>>, %arg5: memref<256x128xf32, #tpu.memory_space<vmem>>, %arg6: memref<1x256x128xf32, #tpu.memory_space<vmem>>) attributes {dimension_semantics = [#tpu.dimension_semantics<parallel>, #tpu.dimension_semantics<parallel>], iteration_bounds = array<i64: 1, 2>, scalar_prefetch = 0 : i64, scratch_operands = 0 : i64, tpu.core_type = #tpu.core_type<tc>, window_params = [{transform_indices = @transform_0, window_bounds = array<i64: 256, 1>}, {transform_indices = @transform_1, window_bounds = array<i64: 256, 1>}, {pipeline_mode = #tpu.pipeline_mode<synchronous>, transform_indices = @transform_2, window_bounds = array<i64: 512, 128>}, {transform_indices = @transform_3, window_bounds = array<i64: 256, 128>}, {transform_indices = @transform_4, window_bounds = array<i64: 1, 256, 128>}]} {
    %c0 = arith.constant 0 : index
    %c0_0 = arith.constant 0 : index
    %0 = vector.load %arg2[%c0, %c0_0] : memref<256x1xi32, #tpu.memory_space<vmem>>, vector<256x1xi32>
    %1 = tpu.iota {dimensions = array<i32: 1>} : vector<256x512xi32>
    %2 = vector.broadcast %0 : vector<256x1xi32> to vector<256x512xi32>
    %3 = arith.cmpi eq, %1, %2 : vector<256x512xi32>
    %4 = arith.extui %3 : vector<256x512xi1> to vector<256x512xi32>
    %5 = arith.sitofp %4 : vector<256x512xi32> to vector<256x512xf32>
    %c0_1 = arith.constant 0 : index
    %c0_2 = arith.constant 0 : index
    %6 = vector.load %arg4[%c0_1, %c0_2] : memref<512x128xf32, #tpu.memory_space<vmem>>, vector<512x128xf32>
    %cst = arith.constant dense<0.000000e+00> : vector<256x128xf32>
    %7 = tpu.matmul %5, %6, %cst {dimension_numbers = #tpu.dot_dimension_numbers<[1], [0], [0], [1], [0, 0, 1, 1], [], []>} : vector<256x512xf32>, vector<512x128xf32>, vector<256x128xf32> -> vector<256x128xf32>
    %c0_3 = arith.constant 0 : index
    %c0_4 = arith.constant 0 : index
    %8 = vector.load %arg5[%c0_3, %c0_4] : memref<256x128xf32, #tpu.memory_space<vmem>>, vector<256x128xf32>
    %9 = arith.addf %7, %8 : vector<256x128xf32>
    %c0_5 = arith.constant 0 : index
    %c0_6 = arith.constant 0 : index
    %10 = vector.load %arg3[%c0_5, %c0_6] : memref<256x1xf32, #tpu.memory_space<vmem>>, vector<256x1xf32>
    %11 = vector.broadcast %10 : vector<256x1xf32> to vector<256x128xf32>
    %12 = arith.mulf %9, %11 : vector<256x128xf32>
    %c0_7 = arith.constant 0 : index
    %c0_8 = arith.constant 0 : index
    %c0_9 = arith.constant 0 : index
    %13 = vector.load %arg6[%c0_7, %c0_8, %c0_9] : memref<1x256x128xf32, #tpu.memory_space<vmem>>, vector<1x256x128xf32>
    %14 = vector.shape_cast %13 : vector<1x256x128xf32> to vector<256x128xf32>
    %15 = vector.shape_cast %12 : vector<256x128xf32> to vector<1x256x128xf32>
    tpu.vector_store %arg6[%c0_7, %c0_8, %c0_9], %15 {strides = array<i32>} : memref<1x256x128xf32, #tpu.memory_space<vmem>>, vector<1x256x128xf32>,
    return
  }
  func.func @transform_0(%arg0: i32, %arg1: i32) -> (i32, i32) {
    %c1_i32 = arith.constant 1 : i32
    %0 = arith.muli %arg1, %c1_i32 : i32
    %1 = arith.addi %0, %arg0 : i32
    %c0_i32 = arith.constant 0 : i32
    %c0_i32_0 = arith.constant 0 : i32
    return %1, %c0_i32 : i32, i32
  }
  func.func @transform_1(%arg0: i32, %arg1: i32) -> (i32, i32) {
    %c1_i32 = arith.constant 1 : i32
    %0 = arith.muli %arg1, %c1_i32 : i32
    %1 = arith.addi %0, %arg0 : i32
    %c0_i32 = arith.constant 0 : i32
    %c0_i32_0 = arith.constant 0 : i32
    return %1, %c0_i32 : i32, i32
  }
  func.func @transform_2(%arg0: i32, %arg1: i32) -> (i32, i32) {
    %c0_i32 = arith.constant 0 : i32
    %c0_i32_0 = arith.constant 0 : i32
    %c0_i32_1 = arith.constant 0 : i32
    return %c0_i32, %c0_i32_0 : i32, i32
  }
  func.func @transform_3(%arg0: i32, %arg1: i32) -> (i32, i32) {
    %c0_i32 = arith.constant 0 : i32
    %c0_i32_0 = arith.constant 0 : i32
    return %arg0, %c0_i32 : i32, i32
  }
  func.func @transform_4(%arg0: i32, %arg1: i32) -> (i32, i32, i32) {
    %c0_i32 = arith.constant 0 : i32
    %c0_i32_0 = arith.constant 0 : i32
    return %arg1, %arg0, %c0_i32 : i32, i32, i32
  }
}

</mosaic_0001>

<llo_original>
// kernel: tpu_custom_call.1
$region0: #{tpu_custom_call.1}
  #allocation0 [shape = 'u32[]', space=smem, size = 0x4, offset = 0x4, fixed_abs, tag = 'smem constant byte address 0x4 - core index']
  #allocation1 [shape = 'u32[144,128]{1,0:T(1,128)}', space=vmem, size = 0x12000, scoped, tag = 'internal scratch']
  %s0 = inlined_call_operand.vmem [shape: s32[512,1], index: 0, kind: input, shape index: {}]
  %s1 = inlined_call_operand.vmem [shape: f32[512,1], index: 1, kind: input, shape index: {}]
  %s2 = inlined_call_operand.vmem [shape: f32[512,128], index: 2, kind: input, shape index: {}]
  %s3 = inlined_call_operand.vmem [shape: f32[256,128], index: 3, kind: input, shape index: {}]
  %s4 = inlined_call_operand.hbm [shape: f32[2,256,128], index: 4, kind: output, shape index: {}]
  %s5 = sld [smem:[#allocation0]]
  $region49: #{tpu_custom_call.1} parent=0
    _
  %s7 = ssub.s32 1, %s5
  %s8 = scalar_select 0, %s7, %s5
  $region1: #{tpu_custom_call.1} parent=0
    #allocation2 [shape = 'u8[262144]{0}', space=vmem, size = 0x40000, scoped, tag = 'output window, operand 0']
    #allocation3 [shape = 's32[2]{0}', space=sflag, size = 0x8, scoped, tag = 'scoped memory for tpu_custom_call.1']
    %9 = vsyncpa [#allocation3], 0
    %s10 = scalar_lea.sflag [#allocation3], 1
    %11 = vsyncpa %s10, 0
    loop: start=0, step=1, limit=4
    $region2: #{tpu_custom_call.1} parent=1 // loop_pre_header
      _
    $region3: #{tpu_custom_call.1} parent=1 // loop_header
      %s13 = sphi 0, %s17
      %p14 = scmp.ge.s32.totalorder %s13, 4
      %s20 = sphi 0, %s32
      %s21 = sphi 0, %s28
      %s22 = sphi 0, %s20
      %s23 = sphi 0, %s21
      %s24 = sphi 0, %s22
      %s25 = sphi 0, %s23
      %s37 = sphi 0, %s39
      %s40 = sphi 0, %s37
      %s41 = sphi 0, %s40
      %s57 = sphi 0, %s41
      %s65 = sphi 0, %s67
      %s68 = sphi 0, %s65
      %s69 = sphi 0, %s68
      %s85 = sphi 0, %s69
      %s89 = sphi 0, %s89
      %s91 = sphi 0, %s89
      %s92 = sphi 0, %s91
      %s106 = sphi 0, %s92
      %s112 = sphi 0, %s114
      %s115 = sphi 0, %s112
      %s116 = sphi 0, %s115
      %s132 = sphi 0, %s116
      %s140 = sphi 0, %s142
      %s143 = sphi 0, %s140
      %s144 = sphi 0, %s143
      %s160 = sphi 0, %s144
    $region4: #{tpu_custom_call.1} parent=1 // loop_header_branch
      %16 = sbr.rel (%p14) target = $region8
    $region5: #{tpu_custom_call.1} parent=1 // loop_body
      %s18 = ssub.s32 %s13, 1
      %s19 = ssub.s32 %s13, 2
      %s26 = sadd.s32 1, %s21
      %p27 = scmp.ge.s32.totalorder %s26, 2
      %s28 = scalar_select %p27, 0, %s26
      %s29 = sadd.s32 1, %s20
      %s30 = scalar_select %p27, %s29, %s20
      %p31 = scmp.ge.s32.totalorder %s30, 1
      %s32 = scalar_select %p31, 0, %s30
      %s33 = sadd.s32 %s21, %s20
      %s34 = sadd.s32 %s28, %s32
      %s35 = ssub.s32 %s33, %s34
      %p36 = scmp.eq.s32.totalorder %s35, 0
      %s38 = sadd.s32 %s37, 1
      %s39 = scalar_select %p36, %s37, %s38
      %p42 = pneg %p36
      %p43 = scmp.eq.s32.totalorder %s13, 1
      %p44 = por %p42, %p43
      %p45 = scmp.ne.s32.totalorder %s37, %s40
      %p46 = scmp.eq.s32.totalorder %s13, 0
      %p47 = por %p45, %p46
      %p48 = scmp.ne.s32.totalorder %s37, %s40
      %p49 = scmp.eq.s32.totalorder %s18, 1
      %p50 = por %p48, %p49
      %p51 = scmp.ne.s32.totalorder %s40, %s41
      %p52 = scmp.eq.s32.totalorder %s18, 0
      %p53 = por %p51, %p52
      %p54 = scmp.ne.s32.totalorder %s40, %s41
      %p55 = scmp.eq.s32.totalorder %s19, 1
      %p56 = por %p54, %p55
      %p58 = scmp.ne.s32.totalorder %s41, %s57
      %p59 = scmp.eq.s32.totalorder %s19, 0
      %p60 = por %p58, %p59
      %s61 = sadd.s32 %s21, %s20
      %s62 = sadd.s32 %s28, %s32
      %s63 = ssub.s32 %s61, %s62
      %p64 = scmp.eq.s32.totalorder %s63, 0
      %s66 = sadd.s32 %s65, 1
      %s67 = scalar_select %p64, %s65, %s66
      %p70 = pneg %p64
      %p71 = scmp.eq.s32.totalorder %s13, 1
      %p72 = por %p70, %p71
      %p73 = scmp.ne.s32.totalorder %s65, %s68
      %p74 = scmp.eq.s32.totalorder %s13, 0
      %p75 = por %p73, %p74
      %p76 = scmp.ne.s32.totalorder %s65, %s68
      %p77 = scmp.eq.s32.totalorder %s18, 1
      %p78 = por %p76, %p77
      %p79 = scmp.ne.s32.totalorder %s68, %s69
      %p80 = scmp.eq.s32.totalorder %s18, 0
      %p81 = por %p79, %p80
      %p82 = scmp.ne.s32.totalorder %s68, %s69
      %p83 = scmp.eq.s32.totalorder %s19, 1
      %p84 = por %p82, %p83
      %p86 = scmp.ne.s32.totalorder %s69, %s85
      %p87 = scmp.eq.s32.totalorder %s19, 0
      %p88 = por %p86, %p87
      %s90 = sadd.s32 %s89, 1
      %p93 = scmp.eq.s32.totalorder %s13, 1
      %p94 = scmp.ne.s32.totalorder %s89, %s91
      %p95 = scmp.eq.s32.totalorder %s13, 0
      %p96 = por %p94, %p95
      %p97 = scmp.ne.s32.totalorder %s89, %s91
      %p98 = scmp.eq.s32.totalorder %s18, 1
      %p99 = por %p97, %p98
      %p100 = scmp.ne.s32.totalorder %s91, %s92
      %p101 = scmp.eq.s32.totalorder %s18, 0
      %p102 = por %p100, %p101
      %p103 = scmp.ne.s32.totalorder %s91, %s92
      %p104 = scmp.eq.s32.totalorder %s19, 1
      %p105 = por %p103, %p104
      %p107 = scmp.ne.s32.totalorder %s92, %s106
      %p108 = scmp.eq.s32.totalorder %s19, 0
      %p109 = por %p107, %p108
      %s110 = ssub.s32 %s20, %s32
      %p111 = scmp.eq.s32.totalorder %s110, 0
      %s113 = sadd.s32 %s112, 1
      %s114 = scalar_select %p111, %s112, %s113
      %p117 = pneg %p111
      %p118 = scmp.eq.s32.totalorder %s13, 1
      %p119 = por %p117, %p118
      %p120 = scmp.ne.s32.totalorder %s112, %s115
      %p121 = scmp.eq.s32.totalorder %s13, 0
      %p122 = por %p120, %p121
      %p123 = scmp.ne.s32.totalorder %s112, %s115
      %p124 = scmp.eq.s32.totalorder %s18, 1
      %p125 = por %p123, %p124
      %p126 = scmp.ne.s32.totalorder %s115, %s116
      %p127 = scmp.eq.s32.totalorder %s18, 0
      %p128 = por %p126, %p127
      %p129 = scmp.ne.s32.totalorder %s115, %s116
      %p130 = scmp.eq.s32.totalorder %s19, 1
      %p131 = por %p129, %p130
      %p133 = scmp.ne.s32.totalorder %s116, %s132
      %p134 = scmp.eq.s32.totalorder %s19, 0
      %p135 = por %p133, %p134
      %s136 = ssub.s32 %s21, %s28
      %s137 = ssub.s32 %s20, %s32
      %s138 = sor.u32 %s136, %s137
      %p139 = scmp.eq.s32.totalorder %s138, 0
      %s141 = sadd.s32 %s140, 1
      %s142 = scalar_select %p139, %s140, %s141
      %p145 = pneg %p139
      %p146 = scmp.eq.s32.totalorder %s13, 1
      %p147 = por %p145, %p146
      %p148 = scmp.ne.s32.totalorder %s140, %s143
      %p149 = scmp.eq.s32.totalorder %s13, 0
      %p150 = por %p148, %p149
      %p151 = scmp.ne.s32.totalorder %s140, %s143
      %p152 = scmp.eq.s32.totalorder %s18, 1
      %p153 = por %p151, %p152
      %p154 = scmp.ne.s32.totalorder %s143, %s144
      %p155 = scmp.eq.s32.totalorder %s18, 0
      %p156 = por %p154, %p155
      %p157 = scmp.ne.s32.totalorder %s143, %s144
      %p158 = scmp.eq.s32.totalorder %s19, 1
      %p159 = por %p157, %p158
      %p161 = scmp.ne.s32.totalorder %s144, %s160
      %p162 = scmp.eq.s32.totalorder %s19, 0
      %p163 = por %p161, %p162
      %p164 = scmp.le.s32.totalorder 1, %s13
      %p165 = scmp.lt.s32.totalorder %s13, 3
      %p166 = pnand %p164, %p165
      %p167 = pneg %p166
      // Predicated region
      $region9: #{tpu_custom_call.1} parent=5 // pred_check
        _
      $region10: #{tpu_custom_call.1} parent=5 // pred_check_branch
        %169 = sbr.rel (%p166) target = $region12
      $region11: #{tpu_custom_call.1} parent=5 // pred_region
        %s170 = ssub.s32 %s13, 1
        // Predicated region
        $region13: #{tpu_custom_call.1} parent=11 // pred_check
          %p171 = pneg %p102
        $region14: #{tpu_custom_call.1} parent=11 // pred_check_branch
          %173 = sbr.rel (%p171) target = $region16
        $region15: #{tpu_custom_call.1} parent=11 // pred_region
          _
        $region16: #{tpu_custom_call.1} parent=11 // pred_fallthru
          _
        // Predicated region
        $region17: #{tpu_custom_call.1} parent=11 // pred_check
          %p174 = pneg %p128
        $region18: #{tpu_custom_call.1} parent=11 // pred_check_branch
          %176 = sbr.rel (%p174) target = $region20
        $region19: #{tpu_custom_call.1} parent=11 // pred_region
          %s177 = smul.u32 32, %s22
          %p178 = scmp.lt.s32.totalorder %s177, 31
          %s179 = scalar_select %p178, %s177, 31
          %s180 = smul.addr %s179, 8
          %s181 = scalar_lea.vmem %s3, %s180
          %s182 = smul.u32 32, %s22
        $region20: #{tpu_custom_call.1} parent=11 // pred_fallthru
          _
      $region12: #{tpu_custom_call.1} parent=5 // pred_fallthru
        _
      %p183 = scmp.lt.s32.totalorder %s13, 2
      // Predicated region
      $region21: #{tpu_custom_call.1} parent=5 // pred_check
        %p184 = pneg %p183
      $region22: #{tpu_custom_call.1} parent=5 // pred_check_branch
        %186 = sbr.rel (%p184) target = $region24
      $region23: #{tpu_custom_call.1} parent=5 // pred_region
        // Predicated region
        $region25: #{tpu_custom_call.1} parent=23 // pred_check
          %p187 = pneg %p47
        $region26: #{tpu_custom_call.1} parent=23 // pred_check_branch
          %189 = sbr.rel (%p187) target = $region28
        $region27: #{tpu_custom_call.1} parent=23 // pred_region
          %s190 = sadd.s32 %s21, %s20
          %s191 = smul.u32 32, %s190
          %p192 = scmp.lt.s32.totalorder %s191, 63
          %s193 = scalar_select %p192, %s191, 63
          %s194 = smul.addr %s193, 8
          %s195 = scalar_lea.vmem %s0, %s194
          %s196 = sadd.s32 %s21, %s20
          %s197 = smul.u32 32, %s196
        $region28: #{tpu_custom_call.1} parent=23 // pred_fallthru
          _
        // Predicated region
        $region29: #{tpu_custom_call.1} parent=23 // pred_check
          %p198 = pneg %p75
        $region30: #{tpu_custom_call.1} parent=23 // pred_check_branch
          %200 = sbr.rel (%p198) target = $region32
        $region31: #{tpu_custom_call.1} parent=23 // pred_region
          %s201 = sadd.s32 %s21, %s20
          %s202 = smul.u32 32, %s201
          %p203 = scmp.lt.s32.totalorder %s202, 63
          %s204 = scalar_select %p203, %s202, 63
          %s205 = smul.addr %s204, 8
          %s206 = scalar_lea.vmem %s1, %s205
          %s207 = sadd.s32 %s21, %s20
          %s208 = smul.u32 32, %s207
        $region32: #{tpu_custom_call.1} parent=23 // pred_fallthru
          _
      $region24: #{tpu_custom_call.1} parent=5 // pred_fallthru
        _
      %p209 = scmp.le.s32.totalorder 1, %s13
      %p210 = scmp.lt.s32.totalorder %s13, 3
      %p211 = pnand %p209, %p210
      %p212 = pneg %p211
      // Predicated region
      $region33: #{tpu_custom_call.1} parent=5 // pred_check
        _
      $region34: #{tpu_custom_call.1} parent=5 // pred_check_branch
        %214 = sbr.rel (%p211) target = $region36
      $region35: #{tpu_custom_call.1} parent=5 // pred_region
        %s215 = ssub.s32 %s13, 1
        %s216 = sadd.s32 %s23, %s22
        %s217 = smul.u32 32, %s216
        %p218 = scmp.lt.s32.totalorder %s217, 63
        %s219 = scalar_select %p218, %s217, 63
        %s220 = smul.addr %s219, 8
        %s221 = scalar_lea.vmem %s0, %s220
        %p222 = pneg %p53
        %p223 = pneg %p50
        %s224 = sadd.s32 %s23, %s22
        %s225 = smul.u32 32, %s224
        %p226 = scmp.lt.s32.totalorder %s225, 63
        %s227 = scalar_select %p226, %s225, 63
        %s228 = smul.addr %s227, 8
        %s229 = scalar_lea.vmem %s1, %s228
        %p230 = pneg %p81
        %p231 = pneg %p78
        %p232 = pneg %p102
        %p233 = pneg %p99
        %s234 = smul.u32 32, %s22
        %p235 = scmp.lt.s32.totalorder %s234, 31
        %s236 = scalar_select %p235, %s234, 31
        %s237 = smul.addr %s236, 8
        %s238 = scalar_lea.vmem %s3, %s237
        %p239 = pneg %p128
        %p240 = pneg %p125
        %p241 = pneg %p156
        %p242 = pneg %p153
        %s243 = sand.u32 %s143, 1
        %s244 = scalar_lea.sflag [#allocation3], %s243
        %s245 = sand.u32 %s143, 1
        %s246 = smul.addr %s245, 256
        %s247 = scalar_lea.vmem [#allocation2], %s246
        %s248 = sadd.s32 %s23, %s22
        %s249 = smul.u32 32, %s248
        %p250 = scmp.lt.s32.totalorder %s249, 63
        %s251 = scalar_select %p250, %s249, 63
        %s252 = smul.addr %s251, 8
        %s253 = scalar_lea.vmem %s0, %s252
        %s254 = sadd.s32 %s23, %s22
        %s255 = smul.u32 32, %s254
        %s256 = sadd.s32 %s23, %s22
        %s257 = smul.u32 32, %s256
        %p258 = scmp.lt.s32.totalorder %s257, 63
        %s259 = scalar_select %p258, %s257, 63
        %s260 = smul.addr %s259, 8
        %s261 = scalar_lea.vmem %s1, %s260
        %s262 = sadd.s32 %s23, %s22
        %s263 = smul.u32 32, %s262
        %s264 = smul.u32 32, %s22
        %p265 = scmp.lt.s32.totalorder %s264, 31
        %s266 = scalar_select %p265, %s264, 31
        %s267 = smul.addr %s266, 8
        %s268 = scalar_lea.vmem %s3, %s267
        %s269 = smul.u32 32, %s22
        %s270 = smul.u32 32, %s22
        %v271 = vld [vmem:[%s253] sm:$0xff]
        %v272 = vld [vmem:[%s253 + $0x8] sm:$0xff]
        %v273 = vld [vmem:[%s253 + $0x10] sm:$0xff]
        %v274 = vld [vmem:[%s253 + $0x18] sm:$0xff]
        %v275 = vld [vmem:[%s253 + $0x20] sm:$0xff]
        %v276 = vld [vmem:[%s253 + $0x28] sm:$0xff]
        %v277 = vld [vmem:[%s253 + $0x30] sm:$0xff]
        %v278 = vld [vmem:[%s253 + $0x38] sm:$0xff]
        %v279 = vld [vmem:[%s253 + $0x40] sm:$0xff]
        %v280 = vld [vmem:[%s253 + $0x48] sm:$0xff]
        %v281 = vld [vmem:[%s253 + $0x50] sm:$0xff]
        %v282 = vld [vmem:[%s253 + $0x58] sm:$0xff]
        %v283 = vld [vmem:[%s253 + $0x60] sm:$0xff]
        %v284 = vld [vmem:[%s253 + $0x68] sm:$0xff]
        %v285 = vld [vmem:[%s253 + $0x70] sm:$0xff]
        %v286 = vld [vmem:[%s253 + $0x78] sm:$0xff]
        %v287 = vld [vmem:[%s253 + $0x80] sm:$0xff]
        %v288 = vld [vmem:[%s253 + $0x88] sm:$0xff]
        %v289 = vld [vmem:[%s253 + $0x90] sm:$0xff]
        %v290 = vld [vmem:[%s253 + $0x98] sm:$0xff]
        %v291 = vld [vmem:[%s253 + $0xa0] sm:$0xff]
        %v292 = vld [vmem:[%s253 + $0xa8] sm:$0xff]
        %v293 = vld [vmem:[%s253 + $0xb0] sm:$0xff]
        %v294 = vld [vmem:[%s253 + $0xb8] sm:$0xff]
        %v295 = vld [vmem:[%s253 + $0xc0] sm:$0xff]
        %v296 = vld [vmem:[%s253 + $0xc8] sm:$0xff]
        %v297 = vld [vmem:[%s253 + $0xd0] sm:$0xff]
        %v298 = vld [vmem:[%s253 + $0xd8] sm:$0xff]
        %v299 = vld [vmem:[%s253 + $0xe0] sm:$0xff]
        %v300 = vld [vmem:[%s253 + $0xe8] sm:$0xff]
        %v301 = vld [vmem:[%s253 + $0xf0] sm:$0xff]
        %v302 = vld [vmem:[%s253 + $0xf8] sm:$0xff]
        %v303 = vlaneseq
        %v304 = vand.u32 %v303, 127
        %v305 = vadd.s32 %v304, 128
        %v306 = vadd.s32 %v304, 256
        %v307 = vadd.s32 %v304, 384
        %308 = vset.pattern.permute.xlu0 0
        %309 = vperm.xlu0 %308, %v271
        %v310 = vpop.permute.xlu0 %309
        %311 = vset.pattern.permute.xlu0 0
        %312 = vperm.xlu0 %311, %v272
        %v313 = vpop.permute.xlu0 %312
        %314 = vset.pattern.permute.xlu0 0
        %315 = vperm.xlu0 %314, %v273
        %v316 = vpop.permute.xlu0 %315
        %317 = vset.pattern.permute.xlu0 0
        %318 = vperm.xlu0 %317, %v274
        %v319 = vpop.permute.xlu0 %318
        %320 = vset.pattern.permute.xlu0 0
        %321 = vperm.xlu0 %320, %v275
        %v322 = vpop.permute.xlu0 %321
        %323 = vset.pattern.permute.xlu0 0
        %324 = vperm.xlu0 %323, %v276
        %v325 = vpop.permute.xlu0 %324
        %326 = vset.pattern.permute.xlu0 0
        %327 = vperm.xlu0 %326, %v277
        %v328 = vpop.permute.xlu0 %327
        %329 = vset.pattern.permute.xlu0 0
        %330 = vperm.xlu0 %329, %v278
        %v331 = vpop.permute.xlu0 %330
        %332 = vset.pattern.permute.xlu0 0
        %333 = vperm.xlu0 %332, %v279
        %v334 = vpop.permute.xlu0 %333
        %335 = vset.pattern.permute.xlu0 0
        %336 = vperm.xlu0 %335, %v280
        %v337 = vpop.permute.xlu0 %336
        %338 = vset.pattern.permute.xlu0 0
        %339 = vperm.xlu0 %338, %v281
        %v340 = vpop.permute.xlu0 %339
        %341 = vset.pattern.permute.xlu0 0
        %342 = vperm.xlu0 %341, %v282
        %v343 = vpop.permute.xlu0 %342
        %344 = vset.pattern.permute.xlu0 0
        %345 = vperm.xlu0 %344, %v283
        %v346 = vpop.permute.xlu0 %345
        %347 = vset.pattern.permute.xlu0 0
        %348 = vperm.xlu0 %347, %v284
        %v349 = vpop.permute.xlu0 %348
        %350 = vset.pattern.permute.xlu0 0
        %351 = vperm.xlu0 %350, %v285
        %v352 = vpop.permute.xlu0 %351
        %353 = vset.pattern.permute.xlu0 0
        %354 = vperm.xlu0 %353, %v286
        %v355 = vpop.permute.xlu0 %354
        %356 = vset.pattern.permute.xlu0 0
        %357 = vperm.xlu0 %356, %v287
        %v358 = vpop.permute.xlu0 %357
        %359 = vset.pattern.permute.xlu0 0
        %360 = vperm.xlu0 %359, %v288
        %v361 = vpop.permute.xlu0 %360
        %362 = vset.pattern.permute.xlu0 0
        %363 = vperm.xlu0 %362, %v289
        %v364 = vpop.permute.xlu0 %363
        %365 = vset.pattern.permute.xlu0 0
        %366 = vperm.xlu0 %365, %v290
        %v367 = vpop.permute.xlu0 %366
        %368 = vset.pattern.permute.xlu0 0
        %369 = vperm.xlu0 %368, %v291
        %v370 = vpop.permute.xlu0 %369
        %371 = vset.pattern.permute.xlu0 0
        %372 = vperm.xlu0 %371, %v292
        %v373 = vpop.permute.xlu0 %372
        %374 = vset.pattern.permute.xlu0 0
        %375 = vperm.xlu0 %374, %v293
        %v376 = vpop.permute.xlu0 %375
        %377 = vset.pattern.permute.xlu0 0
        %378 = vperm.xlu0 %377, %v294
        %v379 = vpop.permute.xlu0 %378
        %380 = vset.pattern.permute.xlu0 0
        %381 = vperm.xlu0 %380, %v295
        %v382 = vpop.permute.xlu0 %381
        %383 = vset.pattern.permute.xlu0 0
        %384 = vperm.xlu0 %383, %v296
        %v385 = vpop.permute.xlu0 %384
        %386 = vset.pattern.permute.xlu0 0
        %387 = vperm.xlu0 %386, %v297
        %v388 = vpop.permute.xlu0 %387
        %389 = vset.pattern.permute.xlu0 0
        %390 = vperm.xlu0 %389, %v298
        %v391 = vpop.permute.xlu0 %390
        %392 = vset.pattern.permute.xlu0 0
        %393 = vperm.xlu0 %392, %v299
        %v394 = vpop.permute.xlu0 %393
        %395 = vset.pattern.permute.xlu0 0
        %396 = vperm.xlu0 %395, %v300
        %v397 = vpop.permute.xlu0 %396
        %398 = vset.pattern.permute.xlu0 0
        %399 = vperm.xlu0 %398, %v301
        %v400 = vpop.permute.xlu0 %399
        %401 = vset.pattern.permute.xlu0 0
        %402 = vperm.xlu0 %401, %v302
        %v403 = vpop.permute.xlu0 %402
        %vm404 = vcmp.eq.s32.totalorder %v304, %v310
        %vm405 = vcmp.eq.s32.totalorder %v305, %v310
        %vm406 = vcmp.eq.s32.totalorder %v306, %v310
        %vm407 = vcmp.eq.s32.totalorder %v307, %v310
        %vm408 = vcmp.eq.s32.totalorder %v304, %v313
        %vm409 = vcmp.eq.s32.totalorder %v305, %v313
        %vm410 = vcmp.eq.s32.totalorder %v306, %v313
        %vm411 = vcmp.eq.s32.totalorder %v307, %v313
        %vm412 = vcmp.eq.s32.totalorder %v304, %v316
        %vm413 = vcmp.eq.s32.totalorder %v305, %v316
        %vm414 = vcmp.eq.s32.totalorder %v306, %v316
        %vm415 = vcmp.eq.s32.totalorder %v307, %v316
        %vm416 = vcmp.eq.s32.totalorder %v304, %v319
        %vm417 = vcmp.eq.s32.totalorder %v305, %v319
        %vm418 = vcmp.eq.s32.totalorder %v306, %v319
        %vm419 = vcmp.eq.s32.totalorder %v307, %v319
        %vm420 = vcmp.eq.s32.totalorder %v304, %v322
        %vm421 = vcmp.eq.s32.totalorder %v305, %v322
        %vm422 = vcmp.eq.s32.totalorder %v306, %v322
        %vm423 = vcmp.eq.s32.totalorder %v307, %v322
        %vm424 = vcmp.eq.s32.totalorder %v304, %v325
        %vm425 = vcmp.eq.s32.totalorder %v305, %v325
        %vm426 = vcmp.eq.s32.totalorder %v306, %v325
        %vm427 = vcmp.eq.s32.totalorder %v307, %v325
        %vm428 = vcmp.eq.s32.totalorder %v304, %v328
        %vm429 = vcmp.eq.s32.totalorder %v305, %v328
        %vm430 = vcmp.eq.s32.totalorder %v306, %v328
        %vm431 = vcmp.eq.s32.totalorder %v307, %v328
        %vm432 = vcmp.eq.s32.totalorder %v304, %v331
        %vm433 = vcmp.eq.s32.totalorder %v305, %v331
        %vm434 = vcmp.eq.s32.totalorder %v306, %v331
        %vm435 = vcmp.eq.s32.totalorder %v307, %v331
        %vm436 = vcmp.eq.s32.totalorder %v304, %v334
        %vm437 = vcmp.eq.s32.totalorder %v305, %v334
        %vm438 = vcmp.eq.s32.totalorder %v306, %v334
        %vm439 = vcmp.eq.s32.totalorder %v307, %v334
        %vm440 = vcmp.eq.s32.totalorder %v304, %v337
        %vm441 = vcmp.eq.s32.totalorder %v305, %v337
        %vm442 = vcmp.eq.s32.totalorder %v306, %v337
        %vm443 = vcmp.eq.s32.totalorder %v307, %v337
        %vm444 = vcmp.eq.s32.totalorder %v304, %v340
        %vm445 = vcmp.eq.s32.totalorder %v305, %v340
        %vm446 = vcmp.eq.s32.totalorder %v306, %v340
        %vm447 = vcmp.eq.s32.totalorder %v307, %v340
        %vm448 = vcmp.eq.s32.totalorder %v304, %v343
        %vm449 = vcmp.eq.s32.totalorder %v305, %v343
        %vm450 = vcmp.eq.s32.totalorder %v306, %v343
        %vm451 = vcmp.eq.s32.totalorder %v307, %v343
        %vm452 = vcmp.eq.s32.totalorder %v304, %v346
        %vm453 = vcmp.eq.s32.totalorder %v305, %v346
        %vm454 = vcmp.eq.s32.totalorder %v306, %v346
        %vm455 = vcmp.eq.s32.totalorder %v307, %v346
        %vm456 = vcmp.eq.s32.totalorder %v304, %v349
        %vm457 = vcmp.eq.s32.totalorder %v305, %v349
        %vm458 = vcmp.eq.s32.totalorder %v306, %v349
        %vm459 = vcmp.eq.s32.totalorder %v307, %v349
        %vm460 = vcmp.eq.s32.totalorder %v304, %v352
        %vm461 = vcmp.eq.s32.totalorder %v305, %v352
        %vm462 = vcmp.eq.s32.totalorder %v306, %v352
        %vm463 = vcmp.eq.s32.totalorder %v307, %v352
        %vm464 = vcmp.eq.s32.totalorder %v304, %v355
        %vm465 = vcmp.eq.s32.totalorder %v305, %v355
        %vm466 = vcmp.eq.s32.totalorder %v306, %v355
        %vm467 = vcmp.eq.s32.totalorder %v307, %v355
        %vm468 = vcmp.eq.s32.totalorder %v304, %v358
        %vm469 = vcmp.eq.s32.totalorder %v305, %v358
        %vm470 = vcmp.eq.s32.totalorder %v306, %v358
        %vm471 = vcmp.eq.s32.totalorder %v307, %v358
        %vm472 = vcmp.eq.s32.totalorder %v304, %v361
        %vm473 = vcmp.eq.s32.totalorder %v305, %v361
        %vm474 = vcmp.eq.s32.totalorder %v306, %v361
        %vm475 = vcmp.eq.s32.totalorder %v307, %v361
        %vm476 = vcmp.eq.s32.totalorder %v304, %v364
        %vm477 = vcmp.eq.s32.totalorder %v305, %v364
        %vm478 = vcmp.eq.s32.totalorder %v306, %v364
        %vm479 = vcmp.eq.s32.totalorder %v307, %v364
        %vm480 = vcmp.eq.s32.totalorder %v304, %v367
        %vm481 = vcmp.eq.s32.totalorder %v305, %v367
        %vm482 = vcmp.eq.s32.totalorder %v306, %v367
        %vm483 = vcmp.eq.s32.totalorder %v307, %v367
        %vm484 = vcmp.eq.s32.totalorder %v304, %v370
        %vm485 = vcmp.eq.s32.totalorder %v305, %v370
        %vm486 = vcmp.eq.s32.totalorder %v306, %v370
        %vm487 = vcmp.eq.s32.totalorder %v307, %v370
        %vm488 = vcmp.eq.s32.totalorder %v304, %v373
        %vm489 = vcmp.eq.s32.totalorder %v305, %v373
        %vm490 = vcmp.eq.s32.totalorder %v306, %v373
        %vm491 = vcmp.eq.s32.totalorder %v307, %v373
        %vm492 = vcmp.eq.s32.totalorder %v304, %v376
        %vm493 = vcmp.eq.s32.totalorder %v305, %v376
        %vm494 = vcmp.eq.s32.totalorder %v306, %v376
        %vm495 = vcmp.eq.s32.totalorder %v307, %v376
        %vm496 = vcmp.eq.s32.totalorder %v304, %v379
        %vm497 = vcmp.eq.s32.totalorder %v305, %v379
        %vm498 = vcmp.eq.s32.totalorder %v306, %v379
        %vm499 = vcmp.eq.s32.totalorder %v307, %v379
        %vm500 = vcmp.eq.s32.totalorder %v304, %v382
        %vm501 = vcmp.eq.s32.totalorder %v305, %v382
        %vm502 = vcmp.eq.s32.totalorder %v306, %v382
        %vm503 = vcmp.eq.s32.totalorder %v307, %v382
        %vm504 = vcmp.eq.s32.totalorder %v304, %v385
        %vm505 = vcmp.eq.s32.totalorder %v305, %v385
        %vm506 = vcmp.eq.s32.totalorder %v306, %v385
        %vm507 = vcmp.eq.s32.totalorder %v307, %v385
        %vm508 = vcmp.eq.s32.totalorder %v304, %v388
        %vm509 = vcmp.eq.s32.totalorder %v305, %v388
        %vm510 = vcmp.eq.s32.totalorder %v306, %v388
        %vm511 = vcmp.eq.s32.totalorder %v307, %v388
        %vm512 = vcmp.eq.s32.totalorder %v304, %v391
        %vm513 = vcmp.eq.s32.totalorder %v305, %v391
        %vm514 = vcmp.eq.s32.totalorder %v306, %v391
        %vm515 = vcmp.eq.s32.totalorder %v307, %v391
        %vm516 = vcmp.eq.s32.totalorder %v304, %v394
        %vm517 = vcmp.eq.s32.totalorder %v305, %v394
        %vm518 = vcmp.eq.s32.totalorder %v306, %v394
        %vm519 = vcmp.eq.s32.totalorder %v307, %v394
        %vm520 = vcmp.eq.s32.totalorder %v304, %v397
        %vm521 = vcmp.eq.s32.totalorder %v305, %v397
        %vm522 = vcmp.eq.s32.totalorder %v306, %v397
        %vm523 = vcmp.eq.s32.totalorder %v307, %v397
        %vm524 = vcmp.eq.s32.totalorder %v304, %v400
        %vm525 = vcmp.eq.s32.totalorder %v305, %v400
        %vm526 = vcmp.eq.s32.totalorder %v306, %v400
        %vm527 = vcmp.eq.s32.totalorder %v307, %v400
        %vm528 = vcmp.eq.s32.totalorder %v304, %v403
        %vm529 = vcmp.eq.s32.totalorder %v305, %v403
        %vm530 = vcmp.eq.s32.totalorder %v306, %v403
        %vm531 = vcmp.eq.s32.totalorder %v307, %v403
        %v532 = vsel %vm404, 1, 0
        %v533 = vsel %vm405, 1, 0
        %v534 = vsel %vm406, 1, 0
        %v535 = vsel %vm407, 1, 0
        %v536 = vsel %vm408, 1, 0
        %v537 = vsel %vm409, 1, 0
        %v538 = vsel %vm410, 1, 0
        %v539 = vsel %vm411, 1, 0
        %v540 = vsel %vm412, 1, 0
        %v541 = vsel %vm413, 1, 0
        %v542 = vsel %vm414, 1, 0
        %v543 = vsel %vm415, 1, 0
        %v544 = vsel %vm416, 1, 0
        %v545 = vsel %vm417, 1, 0
        %v546 = vsel %vm418, 1, 0
        %v547 = vsel %vm419, 1, 0
        %v548 = vsel %vm420, 1, 0
        %v549 = vsel %vm421, 1, 0
        %v550 = vsel %vm422, 1, 0
        %v551 = vsel %vm423, 1, 0
        %v552 = vsel %vm424, 1, 0
        %v553 = vsel %vm425, 1, 0
        %v554 = vsel %vm426, 1, 0
        %v555 = vsel %vm427, 1, 0
        %v556 = vsel %vm428, 1, 0
        %v557 = vsel %vm429, 1, 0
        %v558 = vsel %vm430, 1, 0
        %v559 = vsel %vm431, 1, 0
        %v560 = vsel %vm432, 1, 0
        %v561 = vsel %vm433, 1, 0
        %v562 = vsel %vm434, 1, 0
        %v563 = vsel %vm435, 1, 0
        %v564 = vsel %vm436, 1, 0
        %v565 = vsel %vm437, 1, 0
        %v566 = vsel %vm438, 1, 0
        %v567 = vsel %vm439, 1, 0
        %v568 = vsel %vm440, 1, 0
        %v569 = vsel %vm441, 1, 0
        %v570 = vsel %vm442, 1, 0
        %v571 = vsel %vm443, 1, 0
        %v572 = vsel %vm444, 1, 0
        %v573 = vsel %vm445, 1, 0
        %v574 = vsel %vm446, 1, 0
        %v575 = vsel %vm447, 1, 0
        %v576 = vsel %vm448, 1, 0
        %v577 = vsel %vm449, 1, 0
        %v578 = vsel %vm450, 1, 0
        %v579 = vsel %vm451, 1, 0
        %v580 = vsel %vm452, 1, 0
        %v581 = vsel %vm453, 1, 0
        %v582 = vsel %vm454, 1, 0
        %v583 = vsel %vm455, 1, 0
        %v584 = vsel %vm456, 1, 0
        %v585 = vsel %vm457, 1, 0
        %v586 = vsel %vm458, 1, 0
        %v587 = vsel %vm459, 1, 0
        %v588 = vsel %vm460, 1, 0
        %v589 = vsel %vm461, 1, 0
        %v590 = vsel %vm462, 1, 0
        %v591 = vsel %vm463, 1, 0
        %v592 = vsel %vm464, 1, 0
        %v593 = vsel %vm465, 1, 0
        %v594 = vsel %vm466, 1, 0
        %v595 = vsel %vm467, 1, 0
        %v596 = vsel %vm468, 1, 0
        %v597 = vsel %vm469, 1, 0
        %v598 = vsel %vm470, 1, 0
        %v599 = vsel %vm471, 1, 0
        %v600 = vsel %vm472, 1, 0
        %v601 = vsel %vm473, 1, 0
        %v602 = vsel %vm474, 1, 0
        %v603 = vsel %vm475, 1, 0
        %v604 = vsel %vm476, 1, 0
        %v605 = vsel %vm477, 1, 0
        %v606 = vsel %vm478, 1, 0
        %v607 = vsel %vm479, 1, 0
        %v608 = vsel %vm480, 1, 0
        %v609 = vsel %vm481, 1, 0
        %v610 = vsel %vm482, 1, 0
        %v611 = vsel %vm483, 1, 0
        %v612 = vsel %vm484, 1, 0
        %v613 = vsel %vm485, 1, 0
        %v614 = vsel %vm486, 1, 0
        %v615 = vsel %vm487, 1, 0
        %v616 = vsel %vm488, 1, 0
        %v617 = vsel %vm489, 1, 0
        %v618 = vsel %vm490, 1, 0
        %v619 = vsel %vm491, 1, 0
        %v620 = vsel %vm492, 1, 0
        %v621 = vsel %vm493, 1, 0
        %v622 = vsel %vm494, 1, 0
        %v623 = vsel %vm495, 1, 0
        %v624 = vsel %vm496, 1, 0
        %v625 = vsel %vm497, 1, 0
        %v626 = vsel %vm498, 1, 0
        %v627 = vsel %vm499, 1, 0
        %v628 = vsel %vm500, 1, 0
        %v629 = vsel %vm501, 1, 0
        %v630 = vsel %vm502, 1, 0
        %v631 = vsel %vm503, 1, 0
        %v632 = vsel %vm504, 1, 0
        %v633 = vsel %vm505, 1, 0
        %v634 = vsel %vm506, 1, 0
        %v635 = vsel %vm507, 1, 0
        %v636 = vsel %vm508, 1, 0
        %v637 = vsel %vm509, 1, 0
        %v638 = vsel %vm510, 1, 0
        %v639 = vsel %vm511, 1, 0
        %v640 = vsel %vm512, 1, 0
        %v641 = vsel %vm513, 1, 0
        %v642 = vsel %vm514, 1, 0
        %v643 = vsel %vm515, 1, 0
        %v644 = vsel %vm516, 1, 0
        %v645 = vsel %vm517, 1, 0
        %v646 = vsel %vm518, 1, 0
        %v647 = vsel %vm519, 1, 0
        %v648 = vsel %vm520, 1, 0
        %v649 = vsel %vm521, 1, 0
        %v650 = vsel %vm522, 1, 0
        %v651 = vsel %vm523, 1, 0
        %v652 = vsel %vm524, 1, 0
        %v653 = vsel %vm525, 1, 0
        %v654 = vsel %vm526, 1, 0
        %v655 = vsel %vm527, 1, 0
        %v656 = vsel %vm528, 1, 0
        %v657 = vsel %vm529, 1, 0
        %v658 = vsel %vm530, 1, 0
        %v659 = vsel %vm531, 1, 0
        %v660 = vcvt.s32.f32 %v532
        %v661 = vcvt.s32.f32 %v533
        %v662 = vcvt.s32.f32 %v534
        %v663 = vcvt.s32.f32 %v535
        %v664 = vcvt.s32.f32 %v536
        %v665 = vcvt.s32.f32 %v537
        %v666 = vcvt.s32.f32 %v538
        %v667 = vcvt.s32.f32 %v539
        %v668 = vcvt.s32.f32 %v540
        %v669 = vcvt.s32.f32 %v541
        %v670 = vcvt.s32.f32 %v542
        %v671 = vcvt.s32.f32 %v543
        %v672 = vcvt.s32.f32 %v544
        %v673 = vcvt.s32.f32 %v545
        %v674 = vcvt.s32.f32 %v546
        %v675 = vcvt.s32.f32 %v547
        %v676 = vcvt.s32.f32 %v548
        %v677 = vcvt.s32.f32 %v549
        %v678 = vcvt.s32.f32 %v550
        %v679 = vcvt.s32.f32 %v551
        %v680 = vcvt.s32.f32 %v552
        %v681 = vcvt.s32.f32 %v553
        %v682 = vcvt.s32.f32 %v554
        %v683 = vcvt.s32.f32 %v555
        %v684 = vcvt.s32.f32 %v556
        %v685 = vcvt.s32.f32 %v557
        %v686 = vcvt.s32.f32 %v558
        %v687 = vcvt.s32.f32 %v559
        %v688 = vcvt.s32.f32 %v560
        %v689 = vcvt.s32.f32 %v561
        %v690 = vcvt.s32.f32 %v562
        %v691 = vcvt.s32.f32 %v563
        %v692 = vcvt.s32.f32 %v564
        %v693 = vcvt.s32.f32 %v565
        %v694 = vcvt.s32.f32 %v566
        %v695 = vcvt.s32.f32 %v567
        %v696 = vcvt.s32.f32 %v568
        %v697 = vcvt.s32.f32 %v569
        %v698 = vcvt.s32.f32 %v570
        %v699 = vcvt.s32.f32 %v571
        %v700 = vcvt.s32.f32 %v572
        %v701 = vcvt.s32.f32 %v573
        %v702 = vcvt.s32.f32 %v574
        %v703 = vcvt.s32.f32 %v575
        %v704 = vcvt.s32.f32 %v576
        %v705 = vcvt.s32.f32 %v577
        %v706 = vcvt.s32.f32 %v578
        %v707 = vcvt.s32.f32 %v579
        %v708 = vcvt.s32.f32 %v580
        %v709 = vcvt.s32.f32 %v581
        %v710 = vcvt.s32.f32 %v582
        %v711 = vcvt.s32.f32 %v583
        %v712 = vcvt.s32.f32 %v584
        %v713 = vcvt.s32.f32 %v585
        %v714 = vcvt.s32.f32 %v586
        %v715 = vcvt.s32.f32 %v587
        %v716 = vcvt.s32.f32 %v588
        %v717 = vcvt.s32.f32 %v589
        %v718 = vcvt.s32.f32 %v590
        %v719 = vcvt.s32.f32 %v591
        %v720 = vcvt.s32.f32 %v592
        %v721 = vcvt.s32.f32 %v593
        %v722 = vcvt.s32.f32 %v594
        %v723 = vcvt.s32.f32 %v595
        %v724 = vcvt.s32.f32 %v596
        %v725 = vcvt.s32.f32 %v597
        %v726 = vcvt.s32.f32 %v598
        %v727 = vcvt.s32.f32 %v599
        %v728 = vcvt.s32.f32 %v600
        %v729 = vcvt.s32.f32 %v601
        %v730 = vcvt.s32.f32 %v602
        %v731 = vcvt.s32.f32 %v603
        %v732 = vcvt.s32.f32 %v604
        %v733 = vcvt.s32.f32 %v605
        %v734 = vcvt.s32.f32 %v606
        %v735 = vcvt.s32.f32 %v607
        %v736 = vcvt.s32.f32 %v608
        %v737 = vcvt.s32.f32 %v609
        %v738 = vcvt.s32.f32 %v610
        %v739 = vcvt.s32.f32 %v611
        %v740 = vcvt.s32.f32 %v612
        %v741 = vcvt.s32.f32 %v613
        %v742 = vcvt.s32.f32 %v614
        %v743 = vcvt.s32.f32 %v615
        %v744 = vcvt.s32.f32 %v616
        %v745 = vcvt.s32.f32 %v617
        %v746 = vcvt.s32.f32 %v618
        %v747 = vcvt.s32.f32 %v619
        %v748 = vcvt.s32.f32 %v620
        %v749 = vcvt.s32.f32 %v621
        %v750 = vcvt.s32.f32 %v622
        %v751 = vcvt.s32.f32 %v623
        %v752 = vcvt.s32.f32 %v624
        %v753 = vcvt.s32.f32 %v625
        %v754 = vcvt.s32.f32 %v626
        %v755 = vcvt.s32.f32 %v627
        %v756 = vcvt.s32.f32 %v628
        %v757 = vcvt.s32.f32 %v629
        %v758 = vcvt.s32.f32 %v630
        %v759 = vcvt.s32.f32 %v631
        %v760 = vcvt.s32.f32 %v632
        %v761 = vcvt.s32.f32 %v633
        %v762 = vcvt.s32.f32 %v634
        %v763 = vcvt.s32.f32 %v635
        %v764 = vcvt.s32.f32 %v636
        %v765 = vcvt.s32.f32 %v637
        %v766 = vcvt.s32.f32 %v638
        %v767 = vcvt.s32.f32 %v639
        %v768 = vcvt.s32.f32 %v640
        %v769 = vcvt.s32.f32 %v641
        %v770 = vcvt.s32.f32 %v642
        %v771 = vcvt.s32.f32 %v643
        %v772 = vcvt.s32.f32 %v644
        %v773 = vcvt.s32.f32 %v645
        %v774 = vcvt.s32.f32 %v646
        %v775 = vcvt.s32.f32 %v647
        %v776 = vcvt.s32.f32 %v648
        %v777 = vcvt.s32.f32 %v649
        %v778 = vcvt.s32.f32 %v650
        %v779 = vcvt.s32.f32 %v651
        %v780 = vcvt.s32.f32 %v652
        %v781 = vcvt.s32.f32 %v653
        %v782 = vcvt.s32.f32 %v654
        %v783 = vcvt.s32.f32 %v655
        %v784 = vcvt.s32.f32 %v656
        %v785 = vcvt.s32.f32 %v657
        %v786 = vcvt.s32.f32 %v658
        %v787 = vcvt.s32.f32 %v659
        %v788 = vld [vmem:[%s2] sm:$0xff]
        %v789 = vld [vmem:[%s2 + $0x8] sm:$0xff]
        %v790 = vld [vmem:[%s2 + $0x10] sm:$0xff]
        %v791 = vld [vmem:[%s2 + $0x18] sm:$0xff]
        %v792 = vld [vmem:[%s2 + $0x20] sm:$0xff]
        %v793 = vld [vmem:[%s2 + $0x28] sm:$0xff]
        %v794 = vld [vmem:[%s2 + $0x30] sm:$0xff]
        %v795 = vld [vmem:[%s2 + $0x38] sm:$0xff]
        %v796 = vld [vmem:[%s2 + $0x40] sm:$0xff]
        %v797 = vld [vmem:[%s2 + $0x48] sm:$0xff]
        %v798 = vld [vmem:[%s2 + $0x50] sm:$0xff]
        %v799 = vld [vmem:[%s2 + $0x58] sm:$0xff]
        %v800 = vld [vmem:[%s2 + $0x60] sm:$0xff]
        %v801 = vld [vmem:[%s2 + $0x68] sm:$0xff]
        %v802 = vld [vmem:[%s2 + $0x70] sm:$0xff]
        %v803 = vld [vmem:[%s2 + $0x78] sm:$0xff]
        %v804 = vld [vmem:[%s2 + $0x80] sm:$0xff]
        %v805 = vld [vmem:[%s2 + $0x88] sm:$0xff]
        %v806 = vld [vmem:[%s2 + $0x90] sm:$0xff]
        %v807 = vld [vmem:[%s2 + $0x98] sm:$0xff]
        %v808 = vld [vmem:[%s2 + $0xa0] sm:$0xff]
        %v809 = vld [vmem:[%s2 + $0xa8] sm:$0xff]
        %v810 = vld [vmem:[%s2 + $0xb0] sm:$0xff]
        %v811 = vld [vmem:[%s2 + $0xb8] sm:$0xff]
        %v812 = vld [vmem:[%s2 + $0xc0] sm:$0xff]
        %v813 = vld [vmem:[%s2 + $0xc8] sm:$0xff]
        %v814 = vld [vmem:[%s2 + $0xd0] sm:$0xff]
        %v815 = vld [vmem:[%s2 + $0xd8] sm:$0xff]
        %v816 = vld [vmem:[%s2 + $0xe0] sm:$0xff]
        %v817 = vld [vmem:[%s2 + $0xe8] sm:$0xff]
        %v818 = vld [vmem:[%s2 + $0xf0] sm:$0xff]
        %v819 = vld [vmem:[%s2 + $0xf8] sm:$0xff]
        %v820 = vld [vmem:[%s2 + $0x100] sm:$0xff]
        %v821 = vld [vmem:[%s2 + $0x108] sm:$0xff]
        %v822 = vld [vmem:[%s2 + $0x110] sm:$0xff]
        %v823 = vld [vmem:[%s2 + $0x118] sm:$0xff]
        %v824 = vld [vmem:[%s2 + $0x120] sm:$0xff]
        %v825 = vld [vmem:[%s2 + $0x128] sm:$0xff]
        %v826 = vld [vmem:[%s2 + $0x130] sm:$0xff]
        %v827 = vld [vmem:[%s2 + $0x138] sm:$0xff]
        %v828 = vld [vmem:[%s2 + $0x140] sm:$0xff]
        %v829 = vld [vmem:[%s2 + $0x148] sm:$0xff]
        %v830 = vld [vmem:[%s2 + $0x150] sm:$0xff]
        %v831 = vld [vmem:[%s2 + $0x158] sm:$0xff]
        %v832 = vld [vmem:[%s2 + $0x160] sm:$0xff]
        %v833 = vld [vmem:[%s2 + $0x168] sm:$0xff]
        %v834 = vld [vmem:[%s2 + $0x170] sm:$0xff]
        %v835 = vld [vmem:[%s2 + $0x178] sm:$0xff]
        %v836 = vld [vmem:[%s2 + $0x180] sm:$0xff]
        %v837 = vld [vmem:[%s2 + $0x188] sm:$0xff]
        %v838 = vld [vmem:[%s2 + $0x190] sm:$0xff]
        %v839 = vld [vmem:[%s2 + $0x198] sm:$0xff]
        %v840 = vld [vmem:[%s2 + $0x1a0] sm:$0xff]
        %v841 = vld [vmem:[%s2 + $0x1a8] sm:$0xff]
        %v842 = vld [vmem:[%s2 + $0x1b0] sm:$0xff]
        %v843 = vld [vmem:[%s2 + $0x1b8] sm:$0xff]
        %v844 = vld [vmem:[%s2 + $0x1c0] sm:$0xff]
        %v845 = vld [vmem:[%s2 + $0x1c8] sm:$0xff]
        %v846 = vld [vmem:[%s2 + $0x1d0] sm:$0xff]
        %v847 = vld [vmem:[%s2 + $0x1d8] sm:$0xff]
        %v848 = vld [vmem:[%s2 + $0x1e0] sm:$0xff]
        %v849 = vld [vmem:[%s2 + $0x1e8] sm:$0xff]
        %v850 = vld [vmem:[%s2 + $0x1f0] sm:$0xff]
        %v851 = vld [vmem:[%s2 + $0x1f8] sm:$0xff]
        %v852 = vld [vmem:[%s268] sm:$0xff]
        %v853 = vld [vmem:[%s268 + $0x8] sm:$0xff]
        %v854 = vld [vmem:[%s268 + $0x10] sm:$0xff]
        %v855 = vld [vmem:[%s268 + $0x18] sm:$0xff]
        %v856 = vld [vmem:[%s268 + $0x20] sm:$0xff]
        %v857 = vld [vmem:[%s268 + $0x28] sm:$0xff]
        %v858 = vld [vmem:[%s268 + $0x30] sm:$0xff]
        %v859 = vld [vmem:[%s268 + $0x38] sm:$0xff]
        %v860 = vld [vmem:[%s268 + $0x40] sm:$0xff]
        %v861 = vld [vmem:[%s268 + $0x48] sm:$0xff]
        %v862 = vld [vmem:[%s268 + $0x50] sm:$0xff]
        %v863 = vld [vmem:[%s268 + $0x58] sm:$0xff]
        %v864 = vld [vmem:[%s268 + $0x60] sm:$0xff]
        %v865 = vld [vmem:[%s268 + $0x68] sm:$0xff]
        %v866 = vld [vmem:[%s268 + $0x70] sm:$0xff]
        %v867 = vld [vmem:[%s268 + $0x78] sm:$0xff]
        %v868 = vld [vmem:[%s268 + $0x80] sm:$0xff]
        %v869 = vld [vmem:[%s268 + $0x88] sm:$0xff]
        %v870 = vld [vmem:[%s268 + $0x90] sm:$0xff]
        %v871 = vld [vmem:[%s268 + $0x98] sm:$0xff]
        %v872 = vld [vmem:[%s268 + $0xa0] sm:$0xff]
        %v873 = vld [vmem:[%s268 + $0xa8] sm:$0xff]
        %v874 = vld [vmem:[%s268 + $0xb0] sm:$0xff]
        %v875 = vld [vmem:[%s268 + $0xb8] sm:$0xff]
        %v876 = vld [vmem:[%s268 + $0xc0] sm:$0xff]
        %v877 = vld [vmem:[%s268 + $0xc8] sm:$0xff]
        %v878 = vld [vmem:[%s268 + $0xd0] sm:$0xff]
        %v879 = vld [vmem:[%s268 + $0xd8] sm:$0xff]
        %v880 = vld [vmem:[%s268 + $0xe0] sm:$0xff]
        %v881 = vld [vmem:[%s268 + $0xe8] sm:$0xff]
        %v882 = vld [vmem:[%s268 + $0xf0] sm:$0xff]
        %v883 = vld [vmem:[%s268 + $0xf8] sm:$0xff]
        %884 = vmatprep.subr.mxu0 0.0
        %885 = vmatpush1.msra.mxu0 %v803
        %886 = vmatprep.subr.mxu0 0.0
        %887 = vmatpush1.msra.mxu0 %v802
        %888 = vmatprep.subr.mxu0 0.0
        %889 = vmatpush1.msra.mxu0 %v801
        %890 = vmatprep.subr.mxu0 0.0
        %891 = vmatpush1.msra.mxu0 %v800
        %892 = vmatprep.subr.mxu0 0.0
        %893 = vmatpush1.msra.mxu0 %v799
        %894 = vmatprep.subr.mxu0 0.0
        %895 = vmatpush1.msra.mxu0 %v798
        %896 = vmatprep.subr.mxu0 0.0
        %897 = vmatpush1.msra.mxu0 %v797
        %898 = vmatprep.subr.mxu0 0.0
        %899 = vmatpush1.msra.mxu0 %v796
        %900 = vmatprep.subr.mxu0 0.0
        %901 = vmatpush1.msra.mxu0 %v795
        %902 = vmatprep.subr.mxu0 0.0
        %903 = vmatpush1.msra.mxu0 %v794
        %904 = vmatprep.subr.mxu0 0.0
        %905 = vmatpush1.msra.mxu0 %v793
        %906 = vmatprep.subr.mxu0 0.0
        %907 = vmatpush1.msra.mxu0 %v792
        %908 = vmatprep.subr.mxu0 0.0
        %909 = vmatpush1.msra.mxu0 %v791
        %910 = vmatprep.subr.mxu0 0.0
        %911 = vmatpush1.msra.mxu0 %v790
        %912 = vmatprep.subr.mxu0 0.0
        %913 = vmatpush1.msra.mxu0 %v789
        %914 = vmatprep.subr.mxu0 0.0
        %915 = vmatpush1.msra.mxu0 %v788
        %916 = vmatprep.subr.mxu0 0.0
        %917 = vmatpush2.msra.mxu0 %v819
        %918 = vmatprep.subr.mxu0 0.0
        %919 = vmatpush2.msra.mxu0 %v818
        %920 = vmatprep.subr.mxu0 0.0
        %921 = vmatpush2.msra.mxu0 %v817
        %922 = vmatprep.subr.mxu0 0.0
        %923 = vmatpush2.msra.mxu0 %v816
        %924 = vmatprep.subr.mxu0 0.0
        %925 = vmatpush2.msra.mxu0 %v815
        %926 = vmatprep.subr.mxu0 0.0
        %927 = vmatpush2.msra.mxu0 %v814
        %928 = vmatprep.subr.mxu0 0.0
        %929 = vmatpush2.msra.mxu0 %v813
        %930 = vmatprep.subr.mxu0 0.0
        %931 = vmatpush2.msra.mxu0 %v812
        %932 = vmatprep.subr.mxu0 0.0
        %933 = vmatpush2.msra.mxu0 %v811
        %934 = vmatprep.subr.mxu0 0.0
        %935 = vmatpush2.msra.mxu0 %v810
        %936 = vmatprep.subr.mxu0 0.0
        %937 = vmatpush2.msra.mxu0 %v809
        %938 = vmatprep.subr.mxu0 0.0
        %939 = vmatpush2.msra.mxu0 %v808
        %940 = vmatprep.subr.mxu0 0.0
        %941 = vmatpush2.msra.mxu0 %v807
        %942 = vmatprep.subr.mxu0 0.0
        %943 = vmatpush2.msra.mxu0 %v806
        %944 = vmatprep.subr.mxu0 0.0
        %945 = vmatpush2.msra.mxu0 %v805
        %946 = vmatprep.subr.mxu0 0.0
        %947 = vmatpush2.msra.mxu0 %v804
        %948 = vmatprep.mubr.f32.mxu0 %v661
        %949 = vmatmul.mubr.f32.gmra.mxu0 %v660
        %v950 = vpop.f32.mrf.mxu0
        %v951 = vadd.f32 %v852, %v950
        %v952 = vpop.f32.mrf.mxu0
        %953 = vmatprep.mubr.f32.mxu0 %v665
        %954 = vmatmul.mubr.f32.gmra.mxu0 %v664
        %v955 = vpop.f32.mrf.mxu0
        %v956 = vadd.f32 %v853, %v955
        %v957 = vpop.f32.mrf.mxu0
        %958 = vmatprep.mubr.f32.mxu0 %v669
        %959 = vmatmul.mubr.f32.gmra.mxu0 %v668
        %v960 = vpop.f32.mrf.mxu0
        %v961 = vadd.f32 %v854, %v960
        %v962 = vpop.f32.mrf.mxu0
        %963 = vmatprep.mubr.f32.mxu0 %v673
        %964 = vmatmul.mubr.f32.gmra.mxu0 %v672
        %v965 = vpop.f32.mrf.mxu0
        %v966 = vadd.f32 %v855, %v965
        %v967 = vpop.f32.mrf.mxu0
        %968 = vmatprep.mubr.f32.mxu0 %v677
        %969 = vmatmul.mubr.f32.gmra.mxu0 %v676
        %v970 = vpop.f32.mrf.mxu0
        %v971 = vadd.f32 %v856, %v970
        %v972 = vpop.f32.mrf.mxu0
        %973 = vmatprep.mubr.f32.mxu0 %v681
        %974 = vmatmul.mubr.f32.gmra.mxu0 %v680
        %v975 = vpop.f32.mrf.mxu0
        %v976 = vadd.f32 %v857, %v975
        %v977 = vpop.f32.mrf.mxu0
        %978 = vmatprep.mubr.f32.mxu0 %v685
        %979 = vmatmul.mubr.f32.gmra.mxu0 %v684
        %v980 = vpop.f32.mrf.mxu0
        %v981 = vadd.f32 %v858, %v980
        %v982 = vpop.f32.mrf.mxu0
        %983 = vmatprep.mubr.f32.mxu0 %v689
        %984 = vmatmul.mubr.f32.gmra.mxu0 %v688
        %v985 = vpop.f32.mrf.mxu0
        %v986 = vadd.f32 %v859, %v985
        %v987 = vpop.f32.mrf.mxu0
        %988 = vmatprep.mubr.f32.mxu0 %v693
        %989 = vmatmul.mubr.f32.gmra.mxu0 %v692
        %v990 = vpop.f32.mrf.mxu0
        %v991 = vadd.f32 %v860, %v990
        %v992 = vpop.f32.mrf.mxu0
        %993 = vmatprep.mubr.f32.mxu0 %v697
        %994 = vmatmul.mubr.f32.gmra.mxu0 %v696
        %v995 = vpop.f32.mrf.mxu0
        %v996 = vadd.f32 %v861, %v995
        %v997 = vpop.f32.mrf.mxu0
        %998 = vmatprep.mubr.f32.mxu0 %v701
        %999 = vmatmul.mubr.f32.gmra.mxu0 %v700
        %v1000 = vpop.f32.mrf.mxu0
        %v1001 = vadd.f32 %v862, %v1000
        %v1002 = vpop.f32.mrf.mxu0
        %1003 = vmatprep.mubr.f32.mxu0 %v705
        %1004 = vmatmul.mubr.f32.gmra.mxu0 %v704
        %v1005 = vpop.f32.mrf.mxu0
        %v1006 = vadd.f32 %v863, %v1005
        %v1007 = vpop.f32.mrf.mxu0
        %1008 = vmatprep.mubr.f32.mxu0 %v709
        %1009 = vmatmul.mubr.f32.gmra.mxu0 %v708
        %v1010 = vpop.f32.mrf.mxu0
        %v1011 = vadd.f32 %v864, %v1010
        %v1012 = vpop.f32.mrf.mxu0
        %1013 = vmatprep.mubr.f32.mxu0 %v713
        %1014 = vmatmul.mubr.f32.gmra.mxu0 %v712
        %v1015 = vpop.f32.mrf.mxu0
        %v1016 = vadd.f32 %v865, %v1015
        %v1017 = vpop.f32.mrf.mxu0
        %1018 = vmatprep.mubr.f32.mxu0 %v717
        %1019 = vmatmul.mubr.f32.gmra.mxu0 %v716
        %v1020 = vpop.f32.mrf.mxu0
        %v1021 = vadd.f32 %v866, %v1020
        %v1022 = vpop.f32.mrf.mxu0
        %1023 = vmatprep.mubr.f32.mxu0 %v721
        %1024 = vmatmul.mubr.f32.gmra.mxu0 %v720
        %v1025 = vpop.f32.mrf.mxu0
        %v1026 = vadd.f32 %v867, %v1025
        %v1027 = vpop.f32.mrf.mxu0
        %1028 = vmatprep.mubr.f32.mxu0 %v725
        %1029 = vmatmul.mubr.f32.gmra.mxu0 %v724
        %v1030 = vpop.f32.mrf.mxu0
        %v1031 = vadd.f32 %v868, %v1030
        %v1032 = vpop.f32.mrf.mxu0
        %1033 = vmatprep.mubr.f32.mxu0 %v729
        %1034 = vmatmul.mubr.f32.gmra.mxu0 %v728
        %v1035 = vpop.f32.mrf.mxu0
        %v1036 = vadd.f32 %v869, %v1035
        %v1037 = vpop.f32.mrf.mxu0
        %1038 = vmatprep.mubr.f32.mxu0 %v733
        %1039 = vmatmul.mubr.f32.gmra.mxu0 %v732
        %v1040 = vpop.f32.mrf.mxu0
        %v1041 = vadd.f32 %v870, %v1040
        %v1042 = vpop.f32.mrf.mxu0
        %1043 = vmatprep.mubr.f32.mxu0 %v737
        %1044 = vmatmul.mubr.f32.gmra.mxu0 %v736
        %v1045 = vpop.f32.mrf.mxu0
        %v1046 = vadd.f32 %v871, %v1045
        %v1047 = vpop.f32.mrf.mxu0
        %1048 = vmatprep.mubr.f32.mxu0 %v741
        %1049 = vmatmul.mubr.f32.gmra.mxu0 %v740
        %v1050 = vpop.f32.mrf.mxu0
        %v1051 = vadd.f32 %v872, %v1050
        %v1052 = vpop.f32.mrf.mxu0
        %1053 = vmatprep.mubr.f32.mxu0 %v745
        %1054 = vmatmul.mubr.f32.gmra.mxu0 %v744
        %v1055 = vpop.f32.mrf.mxu0
        %v1056 = vadd.f32 %v873, %v1055
        %v1057 = vpop.f32.mrf.mxu0
        %1058 = vmatprep.mubr.f32.mxu0 %v749
        %1059 = vmatmul.mubr.f32.gmra.mxu0 %v748
        %v1060 = vpop.f32.mrf.mxu0
        %v1061 = vadd.f32 %v874, %v1060
        %v1062 = vpop.f32.mrf.mxu0
        %1063 = vmatprep.mubr.f32.mxu0 %v753
        %1064 = vmatmul.mubr.f32.gmra.mxu0 %v752
        %v1065 = vpop.f32.mrf.mxu0
        %v1066 = vadd.f32 %v875, %v1065
        %v1067 = vpop.f32.mrf.mxu0
        %1068 = vmatprep.mubr.f32.mxu0 %v757
        %1069 = vmatmul.mubr.f32.gmra.mxu0 %v756
        %v1070 = vpop.f32.mrf.mxu0
        %v1071 = vadd.f32 %v876, %v1070
        %v1072 = vpop.f32.mrf.mxu0
        %1073 = vmatprep.mubr.f32.mxu0 %v761
        %1074 = vmatmul.mubr.f32.gmra.mxu0 %v760
        %v1075 = vpop.f32.mrf.mxu0
        %v1076 = vadd.f32 %v877, %v1075
        %v1077 = vpop.f32.mrf.mxu0
        %1078 = vmatprep.mubr.f32.mxu0 %v765
        %1079 = vmatmul.mubr.f32.gmra.mxu0 %v764
        %v1080 = vpop.f32.mrf.mxu0
        %v1081 = vadd.f32 %v878, %v1080
        %v1082 = vpop.f32.mrf.mxu0
        %1083 = vmatprep.mubr.f32.mxu0 %v769
        %1084 = vmatmul.mubr.f32.gmra.mxu0 %v768
        %v1085 = vpop.f32.mrf.mxu0
        %v1086 = vadd.f32 %v879, %v1085
        %v1087 = vpop.f32.mrf.mxu0
        %1088 = vmatprep.mubr.f32.mxu0 %v773
        %1089 = vmatmul.mubr.f32.gmra.mxu0 %v772
        %v1090 = vpop.f32.mrf.mxu0
        %v1091 = vadd.f32 %v880, %v1090
        %v1092 = vpop.f32.mrf.mxu0
        %1093 = vmatprep.mubr.f32.mxu0 %v777
        %1094 = vmatmul.mubr.f32.gmra.mxu0 %v776
        %v1095 = vpop.f32.mrf.mxu0
        %v1096 = vadd.f32 %v881, %v1095
        %v1097 = vpop.f32.mrf.mxu0
        %1098 = vmatprep.mubr.f32.mxu0 %v781
        %1099 = vmatmul.mubr.f32.gmra.mxu0 %v780
        %v1100 = vpop.f32.mrf.mxu0
        %v1101 = vadd.f32 %v882, %v1100
        %v1102 = vpop.f32.mrf.mxu0
        %1103 = vmatprep.mubr.f32.mxu0 %v785
        %1104 = vmatmul.mubr.f32.gmra.mxu0 %v784
        %v1105 = vpop.f32.mrf.mxu0
        %v1106 = vadd.f32 %v883, %v1105
        %v1107 = vpop.f32.mrf.mxu0
        %1108 = vdwg.mxu0
        %1109 = vmatprep.subr.mxu0 0.0
        %1110 = vmatpush1.msra.mxu0 %v835
        %1111 = vmatprep.subr.mxu0 0.0
        %1112 = vmatpush1.msra.mxu0 %v834
        %1113 = vmatprep.subr.mxu0 0.0
        %1114 = vmatpush1.msra.mxu0 %v833
        %1115 = vmatprep.subr.mxu0 0.0
        %1116 = vmatpush1.msra.mxu0 %v832
        %1117 = vmatprep.subr.mxu0 0.0
        %1118 = vmatpush1.msra.mxu0 %v831
        %1119 = vmatprep.subr.mxu0 0.0
        %1120 = vmatpush1.msra.mxu0 %v830
        %1121 = vmatprep.subr.mxu0 0.0
        %1122 = vmatpush1.msra.mxu0 %v829
        %1123 = vmatprep.subr.mxu0 0.0
        %1124 = vmatpush1.msra.mxu0 %v828
        %1125 = vmatprep.subr.mxu0 0.0
        %1126 = vmatpush1.msra.mxu0 %v827
        %1127 = vmatprep.subr.mxu0 0.0
        %1128 = vmatpush1.msra.mxu0 %v826
        %1129 = vmatprep.subr.mxu0 0.0
        %1130 = vmatpush1.msra.mxu0 %v825
        %1131 = vmatprep.subr.mxu0 0.0
        %1132 = vmatpush1.msra.mxu0 %v824
        %1133 = vmatprep.subr.mxu0 0.0
        %1134 = vmatpush1.msra.mxu0 %v823
        %1135 = vmatprep.subr.mxu0 0.0
        %1136 = vmatpush1.msra.mxu0 %v822
        %1137 = vmatprep.subr.mxu0 0.0
        %1138 = vmatpush1.msra.mxu0 %v821
        %1139 = vmatprep.subr.mxu0 0.0
        %1140 = vmatpush1.msra.mxu0 %v820
        %1141 = vmatprep.subr.mxu0 0.0
        %1142 = vmatpush2.msra.mxu0 %v851
        %1143 = vmatprep.subr.mxu0 0.0
        %1144 = vmatpush2.msra.mxu0 %v850
        %1145 = vmatprep.subr.mxu0 0.0
        %1146 = vmatpush2.msra.mxu0 %v849
        %1147 = vmatprep.subr.mxu0 0.0
        %1148 = vmatpush2.msra.mxu0 %v848
        %1149 = vmatprep.subr.mxu0 0.0
        %1150 = vmatpush2.msra.mxu0 %v847
        %1151 = vmatprep.subr.mxu0 0.0
        %1152 = vmatpush2.msra.mxu0 %v846
        %1153 = vmatprep.subr.mxu0 0.0
        %1154 = vmatpush2.msra.mxu0 %v845
        %1155 = vmatprep.subr.mxu0 0.0
        %1156 = vmatpush2.msra.mxu0 %v844
        %1157 = vmatprep.subr.mxu0 0.0
        %1158 = vmatpush2.msra.mxu0 %v843
        %1159 = vmatprep.subr.mxu0 0.0
        %1160 = vmatpush2.msra.mxu0 %v842
        %1161 = vmatprep.subr.mxu0 0.0
        %1162 = vmatpush2.msra.mxu0 %v841
        %1163 = vmatprep.subr.mxu0 0.0
        %1164 = vmatpush2.msra.mxu0 %v840
        %1165 = vmatprep.subr.mxu0 0.0
        %1166 = vmatpush2.msra.mxu0 %v839
        %1167 = vmatprep.subr.mxu0 0.0
        %1168 = vmatpush2.msra.mxu0 %v838
        %1169 = vmatprep.subr.mxu0 0.0
        %1170 = vmatpush2.msra.mxu0 %v837
        %1171 = vmatprep.subr.mxu0 0.0
        %1172 = vmatpush2.msra.mxu0 %v836
        %1173 = vmatprep.mubr.f32.mxu0 %v663
        %1174 = vmatmul.mubr.f32.gmra.mxu0 %v662
        %v1175 = vpop.f32.mrf.mxu0
        %v1176 = vadd.f32 %v951, %v1175
        %v1177 = vpop.f32.mrf.mxu0
        %1178 = vmatprep.mubr.f32.mxu0 %v667
        %1179 = vmatmul.mubr.f32.gmra.mxu0 %v666
        %v1180 = vpop.f32.mrf.mxu0
        %v1181 = vadd.f32 %v956, %v1180
        %v1182 = vpop.f32.mrf.mxu0
        %1183 = vmatprep.mubr.f32.mxu0 %v671
        %1184 = vmatmul.mubr.f32.gmra.mxu0 %v670
        %v1185 = vpop.f32.mrf.mxu0
        %v1186 = vadd.f32 %v961, %v1185
        %v1187 = vpop.f32.mrf.mxu0
        %1188 = vmatprep.mubr.f32.mxu0 %v675
        %1189 = vmatmul.mubr.f32.gmra.mxu0 %v674
        %v1190 = vpop.f32.mrf.mxu0
        %v1191 = vadd.f32 %v966, %v1190
        %v1192 = vpop.f32.mrf.mxu0
        %1193 = vmatprep.mubr.f32.mxu0 %v679
        %1194 = vmatmul.mubr.f32.gmra.mxu0 %v678
        %v1195 = vpop.f32.mrf.mxu0
        %v1196 = vadd.f32 %v971, %v1195
        %v1197 = vpop.f32.mrf.mxu0
        %1198 = vmatprep.mubr.f32.mxu0 %v683
        %1199 = vmatmul.mubr.f32.gmra.mxu0 %v682
        %v1200 = vpop.f32.mrf.mxu0
        %v1201 = vadd.f32 %v976, %v1200
        %v1202 = vpop.f32.mrf.mxu0
        %1203 = vmatprep.mubr.f32.mxu0 %v687
        %1204 = vmatmul.mubr.f32.gmra.mxu0 %v686
        %v1205 = vpop.f32.mrf.mxu0
        %v1206 = vadd.f32 %v981, %v1205
        %v1207 = vpop.f32.mrf.mxu0
        %1208 = vmatprep.mubr.f32.mxu0 %v691
        %1209 = vmatmul.mubr.f32.gmra.mxu0 %v690
        %v1210 = vpop.f32.mrf.mxu0
        %v1211 = vadd.f32 %v986, %v1210
        %v1212 = vpop.f32.mrf.mxu0
        %1213 = vmatprep.mubr.f32.mxu0 %v695
        %1214 = vmatmul.mubr.f32.gmra.mxu0 %v694
        %v1215 = vpop.f32.mrf.mxu0
        %v1216 = vadd.f32 %v991, %v1215
        %v1217 = vpop.f32.mrf.mxu0
        %1218 = vmatprep.mubr.f32.mxu0 %v699
        %1219 = vmatmul.mubr.f32.gmra.mxu0 %v698
        %v1220 = vpop.f32.mrf.mxu0
        %v1221 = vadd.f32 %v996, %v1220
        %v1222 = vpop.f32.mrf.mxu0
        %1223 = vmatprep.mubr.f32.mxu0 %v703
        %1224 = vmatmul.mubr.f32.gmra.mxu0 %v702
        %v1225 = vpop.f32.mrf.mxu0
        %v1226 = vadd.f32 %v1001, %v1225
        %v1227 = vpop.f32.mrf.mxu0
        %1228 = vmatprep.mubr.f32.mxu0 %v707
        %1229 = vmatmul.mubr.f32.gmra.mxu0 %v706
        %v1230 = vpop.f32.mrf.mxu0
        %v1231 = vadd.f32 %v1006, %v1230
        %v1232 = vpop.f32.mrf.mxu0
        %1233 = vmatprep.mubr.f32.mxu0 %v711
        %1234 = vmatmul.mubr.f32.gmra.mxu0 %v710
        %v1235 = vpop.f32.mrf.mxu0
        %v1236 = vadd.f32 %v1011, %v1235
        %v1237 = vpop.f32.mrf.mxu0
        %1238 = vmatprep.mubr.f32.mxu0 %v715
        %1239 = vmatmul.mubr.f32.gmra.mxu0 %v714
        %v1240 = vpop.f32.mrf.mxu0
        %v1241 = vadd.f32 %v1016, %v1240
        %v1242 = vpop.f32.mrf.mxu0
        %1243 = vmatprep.mubr.f32.mxu0 %v719
        %1244 = vmatmul.mubr.f32.gmra.mxu0 %v718
        %v1245 = vpop.f32.mrf.mxu0
        %v1246 = vadd.f32 %v1021, %v1245
        %v1247 = vpop.f32.mrf.mxu0
        %1248 = vmatprep.mubr.f32.mxu0 %v723
        %1249 = vmatmul.mubr.f32.gmra.mxu0 %v722
        %v1250 = vpop.f32.mrf.mxu0
        %v1251 = vadd.f32 %v1026, %v1250
        %v1252 = vpop.f32.mrf.mxu0
        %1253 = vmatprep.mubr.f32.mxu0 %v727
        %1254 = vmatmul.mubr.f32.gmra.mxu0 %v726
        %v1255 = vpop.f32.mrf.mxu0
        %v1256 = vadd.f32 %v1031, %v1255
        %v1257 = vpop.f32.mrf.mxu0
        %1258 = vmatprep.mubr.f32.mxu0 %v731
        %1259 = vmatmul.mubr.f32.gmra.mxu0 %v730
        %v1260 = vpop.f32.mrf.mxu0
        %v1261 = vadd.f32 %v1036, %v1260
        %v1262 = vpop.f32.mrf.mxu0
        %1263 = vmatprep.mubr.f32.mxu0 %v735
        %1264 = vmatmul.mubr.f32.gmra.mxu0 %v734
        %v1265 = vpop.f32.mrf.mxu0
        %v1266 = vadd.f32 %v1041, %v1265
        %v1267 = vpop.f32.mrf.mxu0
        %1268 = vmatprep.mubr.f32.mxu0 %v739
        %1269 = vmatmul.mubr.f32.gmra.mxu0 %v738
        %v1270 = vpop.f32.mrf.mxu0
        %v1271 = vadd.f32 %v1046, %v1270
        %v1272 = vpop.f32.mrf.mxu0
        %1273 = vmatprep.mubr.f32.mxu0 %v743
        %1274 = vmatmul.mubr.f32.gmra.mxu0 %v742
        %v1275 = vpop.f32.mrf.mxu0
        %v1276 = vadd.f32 %v1051, %v1275
        %v1277 = vpop.f32.mrf.mxu0
        %1278 = vmatprep.mubr.f32.mxu0 %v747
        %1279 = vmatmul.mubr.f32.gmra.mxu0 %v746
        %v1280 = vpop.f32.mrf.mxu0
        %v1281 = vadd.f32 %v1056, %v1280
        %v1282 = vpop.f32.mrf.mxu0
        %1283 = vmatprep.mubr.f32.mxu0 %v751
        %1284 = vmatmul.mubr.f32.gmra.mxu0 %v750
        %v1285 = vpop.f32.mrf.mxu0
        %v1286 = vadd.f32 %v1061, %v1285
        %v1287 = vpop.f32.mrf.mxu0
        %1288 = vmatprep.mubr.f32.mxu0 %v755
        %1289 = vmatmul.mubr.f32.gmra.mxu0 %v754
        %v1290 = vpop.f32.mrf.mxu0
        %v1291 = vadd.f32 %v1066, %v1290
        %v1292 = vpop.f32.mrf.mxu0
        %1293 = vmatprep.mubr.f32.mxu0 %v759
        %1294 = vmatmul.mubr.f32.gmra.mxu0 %v758
        %v1295 = vpop.f32.mrf.mxu0
        %v1296 = vadd.f32 %v1071, %v1295
        %v1297 = vpop.f32.mrf.mxu0
        %1298 = vmatprep.mubr.f32.mxu0 %v763
        %1299 = vmatmul.mubr.f32.gmra.mxu0 %v762
        %v1300 = vpop.f32.mrf.mxu0
        %v1301 = vadd.f32 %v1076, %v1300
        %v1302 = vpop.f32.mrf.mxu0
        %1303 = vmatprep.mubr.f32.mxu0 %v767
        %1304 = vmatmul.mubr.f32.gmra.mxu0 %v766
        %v1305 = vpop.f32.mrf.mxu0
        %v1306 = vadd.f32 %v1081, %v1305
        %v1307 = vpop.f32.mrf.mxu0
        %1308 = vmatprep.mubr.f32.mxu0 %v771
        %1309 = vmatmul.mubr.f32.gmra.mxu0 %v770
        %v1310 = vpop.f32.mrf.mxu0
        %v1311 = vadd.f32 %v1086, %v1310
        %v1312 = vpop.f32.mrf.mxu0
        %1313 = vmatprep.mubr.f32.mxu0 %v775
        %1314 = vmatmul.mubr.f32.gmra.mxu0 %v774
        %v1315 = vpop.f32.mrf.mxu0
        %v1316 = vadd.f32 %v1091, %v1315
        %v1317 = vpop.f32.mrf.mxu0
        %1318 = vmatprep.mubr.f32.mxu0 %v779
        %1319 = vmatmul.mubr.f32.gmra.mxu0 %v778
        %v1320 = vpop.f32.mrf.mxu0
        %v1321 = vadd.f32 %v1096, %v1320
        %v1322 = vpop.f32.mrf.mxu0
        %1323 = vmatprep.mubr.f32.mxu0 %v783
        %1324 = vmatmul.mubr.f32.gmra.mxu0 %v782
        %v1325 = vpop.f32.mrf.mxu0
        %v1326 = vadd.f32 %v1101, %v1325
        %v1327 = vpop.f32.mrf.mxu0
        %1328 = vmatprep.mubr.f32.mxu0 %v787
        %1329 = vmatmul.mubr.f32.gmra.mxu0 %v786
        %v1330 = vpop.f32.mrf.mxu0
        %v1331 = vadd.f32 %v1106, %v1330
        %v1332 = vpop.f32.mrf.mxu0
        %1333 = vdwg.mxu0
        %v1334 = vld [vmem:[%s261] sm:$0xff]
        %v1335 = vld [vmem:[%s261 + $0x8] sm:$0xff]
        %v1336 = vld [vmem:[%s261 + $0x10] sm:$0xff]
        %v1337 = vld [vmem:[%s261 + $0x18] sm:$0xff]
        %v1338 = vld [vmem:[%s261 + $0x20] sm:$0xff]
        %v1339 = vld [vmem:[%s261 + $0x28] sm:$0xff]
        %v1340 = vld [vmem:[%s261 + $0x30] sm:$0xff]
        %v1341 = vld [vmem:[%s261 + $0x38] sm:$0xff]
        %v1342 = vld [vmem:[%s261 + $0x40] sm:$0xff]
        %v1343 = vld [vmem:[%s261 + $0x48] sm:$0xff]
        %v1344 = vld [vmem:[%s261 + $0x50] sm:$0xff]
        %v1345 = vld [vmem:[%s261 + $0x58] sm:$0xff]
        %v1346 = vld [vmem:[%s261 + $0x60] sm:$0xff]
        %v1347 = vld [vmem:[%s261 + $0x68] sm:$0xff]
        %v1348 = vld [vmem:[%s261 + $0x70] sm:$0xff]
        %v1349 = vld [vmem:[%s261 + $0x78] sm:$0xff]
        %v1350 = vld [vmem:[%s261 + $0x80] sm:$0xff]
        %v1351 = vld [vmem:[%s261 + $0x88] sm:$0xff]
        %v1352 = vld [vmem:[%s261 + $0x90] sm:$0xff]
        %v1353 = vld [vmem:[%s261 + $0x98] sm:$0xff]
        %v1354 = vld [vmem:[%s261 + $0xa0] sm:$0xff]
        %v1355 = vld [vmem:[%s261 + $0xa8] sm:$0xff]
        %v1356 = vld [vmem:[%s261 + $0xb0] sm:$0xff]
        %v1357 = vld [vmem:[%s261 + $0xb8] sm:$0xff]
        %v1358 = vld [vmem:[%s261 + $0xc0] sm:$0xff]
        %v1359 = vld [vmem:[%s261 + $0xc8] sm:$0xff]
        %v1360 = vld [vmem:[%s261 + $0xd0] sm:$0xff]
        %v1361 = vld [vmem:[%s261 + $0xd8] sm:$0xff]
        %v1362 = vld [vmem:[%s261 + $0xe0] sm:$0xff]
        %v1363 = vld [vmem:[%s261 + $0xe8] sm:$0xff]
        %v1364 = vld [vmem:[%s261 + $0xf0] sm:$0xff]
        %v1365 = vld [vmem:[%s261 + $0xf8] sm:$0xff]
        %1367 = vset.pattern.permute.xlu0 0
        %1368 = vperm.xlu0 %1367, %v1334
        %v1369 = vpop.permute.xlu0 %1368
        %1372 = vset.pattern.permute.xlu0 0
        %1373 = vperm.xlu0 %1372, %v1335
        %v1374 = vpop.permute.xlu0 %1373
        %1377 = vset.pattern.permute.xlu0 0
        %1378 = vperm.xlu0 %1377, %v1336
        %v1379 = vpop.permute.xlu0 %1378
        %1382 = vset.pattern.permute.xlu0 0
        %1383 = vperm.xlu0 %1382, %v1337
        %v1384 = vpop.permute.xlu0 %1383
        %1387 = vset.pattern.permute.xlu0 0
        %1388 = vperm.xlu0 %1387, %v1338
        %v1389 = vpop.permute.xlu0 %1388
        %1392 = vset.pattern.permute.xlu0 0
        %1393 = vperm.xlu0 %1392, %v1339
        %v1394 = vpop.permute.xlu0 %1393
        %1397 = vset.pattern.permute.xlu0 0
        %1398 = vperm.xlu0 %1397, %v1340
        %v1399 = vpop.permute.xlu0 %1398
        %1402 = vset.pattern.permute.xlu0 0
        %1403 = vperm.xlu0 %1402, %v1341
        %v1404 = vpop.permute.xlu0 %1403
        %1407 = vset.pattern.permute.xlu0 0
        %1408 = vperm.xlu0 %1407, %v1342
        %v1409 = vpop.permute.xlu0 %1408
        %1412 = vset.pattern.permute.xlu0 0
        %1413 = vperm.xlu0 %1412, %v1343
        %v1414 = vpop.permute.xlu0 %1413
        %1417 = vset.pattern.permute.xlu0 0
        %1418 = vperm.xlu0 %1417, %v1344
        %v1419 = vpop.permute.xlu0 %1418
        %1422 = vset.pattern.permute.xlu0 0
        %1423 = vperm.xlu0 %1422, %v1345
        %v1424 = vpop.permute.xlu0 %1423
        %1427 = vset.pattern.permute.xlu0 0
        %1428 = vperm.xlu0 %1427, %v1346
        %v1429 = vpop.permute.xlu0 %1428
        %1432 = vset.pattern.permute.xlu0 0
        %1433 = vperm.xlu0 %1432, %v1347
        %v1434 = vpop.permute.xlu0 %1433
        %1437 = vset.pattern.permute.xlu0 0
        %1438 = vperm.xlu0 %1437, %v1348
        %v1439 = vpop.permute.xlu0 %1438
        %1442 = vset.pattern.permute.xlu0 0
        %1443 = vperm.xlu0 %1442, %v1349
        %v1444 = vpop.permute.xlu0 %1443
        %1447 = vset.pattern.permute.xlu0 0
        %1448 = vperm.xlu0 %1447, %v1350
        %v1449 = vpop.permute.xlu0 %1448
        %1452 = vset.pattern.permute.xlu0 0
        %1453 = vperm.xlu0 %1452, %v1351
        %v1454 = vpop.permute.xlu0 %1453
        %1457 = vset.pattern.permute.xlu0 0
        %1458 = vperm.xlu0 %1457, %v1352
        %v1459 = vpop.permute.xlu0 %1458
        %1462 = vset.pattern.permute.xlu0 0
        %1463 = vperm.xlu0 %1462, %v1353
        %v1464 = vpop.permute.xlu0 %1463
        %1467 = vset.pattern.permute.xlu0 0
        %1468 = vperm.xlu0 %1467, %v1354
        %v1469 = vpop.permute.xlu0 %1468
        %1472 = vset.pattern.permute.xlu0 0
        %1473 = vperm.xlu0 %1472, %v1355
        %v1474 = vpop.permute.xlu0 %1473
        %1477 = vset.pattern.permute.xlu0 0
        %1478 = vperm.xlu0 %1477, %v1356
        %v1479 = vpop.permute.xlu0 %1478
        %1482 = vset.pattern.permute.xlu0 0
        %1483 = vperm.xlu0 %1482, %v1357
        %v1484 = vpop.permute.xlu0 %1483
        %1487 = vset.pattern.permute.xlu0 0
        %1488 = vperm.xlu0 %1487, %v1358
        %v1489 = vpop.permute.xlu0 %1488
        %1492 = vset.pattern.permute.xlu0 0
        %1493 = vperm.xlu0 %1492, %v1359
        %v1494 = vpop.permute.xlu0 %1493
        %1497 = vset.pattern.permute.xlu0 0
        %1498 = vperm.xlu0 %1497, %v1360
        %v1499 = vpop.permute.xlu0 %1498
        %1502 = vset.pattern.permute.xlu0 0
        %1503 = vperm.xlu0 %1502, %v1361
        %v1504 = vpop.permute.xlu0 %1503
        %1507 = vset.pattern.permute.xlu0 0
        %1508 = vperm.xlu0 %1507, %v1362
        %v1509 = vpop.permute.xlu0 %1508
        %1512 = vset.pattern.permute.xlu0 0
        %1513 = vperm.xlu0 %1512, %v1363
        %v1514 = vpop.permute.xlu0 %1513
        %1517 = vset.pattern.permute.xlu0 0
        %1518 = vperm.xlu0 %1517, %v1364
        %v1519 = vpop.permute.xlu0 %1518
        %1522 = vset.pattern.permute.xlu0 0
        %1523 = vperm.xlu0 %1522, %v1365
        %v1524 = vpop.permute.xlu0 %1523
        %v1526 = vmul.f32 %v1176, %v1369
        %v1527 = vmul.f32 %v1181, %v1374
        %v1528 = vmul.f32 %v1186, %v1379
        %v1529 = vmul.f32 %v1191, %v1384
        %v1530 = vmul.f32 %v1196, %v1389
        %v1531 = vmul.f32 %v1201, %v1394
        %v1532 = vmul.f32 %v1206, %v1399
        %v1533 = vmul.f32 %v1211, %v1404
        %v1534 = vmul.f32 %v1216, %v1409
        %v1535 = vmul.f32 %v1221, %v1414
        %v1536 = vmul.f32 %v1226, %v1419
        %v1537 = vmul.f32 %v1231, %v1424
        %v1538 = vmul.f32 %v1236, %v1429
        %v1539 = vmul.f32 %v1241, %v1434
        %v1540 = vmul.f32 %v1246, %v1439
        %v1541 = vmul.f32 %v1251, %v1444
        %v1542 = vmul.f32 %v1256, %v1449
        %v1543 = vmul.f32 %v1261, %v1454
        %v1544 = vmul.f32 %v1266, %v1459
        %v1545 = vmul.f32 %v1271, %v1464
        %v1546 = vmul.f32 %v1276, %v1469
        %v1547 = vmul.f32 %v1281, %v1474
        %v1548 = vmul.f32 %v1286, %v1479
        %v1549 = vmul.f32 %v1291, %v1484
        %v1550 = vmul.f32 %v1296, %v1489
        %v1551 = vmul.f32 %v1301, %v1494
        %v1552 = vmul.f32 %v1306, %v1499
        %v1553 = vmul.f32 %v1311, %v1504
        %v1554 = vmul.f32 %v1316, %v1509
        %v1555 = vmul.f32 %v1321, %v1514
        %v1556 = vmul.f32 %v1326, %v1519
        %v1557 = vmul.f32 %v1331, %v1524
        %1558 = vst [vmem:[%s247] sm:$0xff] %v1526
        %1559 = vst [vmem:[%s247 + $0x8] sm:$0xff] %v1527
        %1560 = vst [vmem:[%s247 + $0x10] sm:$0xff] %v1528
        %1561 = vst [vmem:[%s247 + $0x18] sm:$0xff] %v1529
        %1562 = vst [vmem:[%s247 + $0x20] sm:$0xff] %v1530
        %1563 = vst [vmem:[%s247 + $0x28] sm:$0xff] %v1531
        %1564 = vst [vmem:[%s247 + $0x30] sm:$0xff] %v1532
        %1565 = vst [vmem:[%s247 + $0x38] sm:$0xff] %v1533
        %1566 = vst [vmem:[%s247 + $0x40] sm:$0xff] %v1534
        %1567 = vst [vmem:[%s247 + $0x48] sm:$0xff] %v1535
        %1568 = vst [vmem:[%s247 + $0x50] sm:$0xff] %v1536
        %1569 = vst [vmem:[%s247 + $0x58] sm:$0xff] %v1537
        %1570 = vst [vmem:[%s247 + $0x60] sm:$0xff] %v1538
        %1571 = vst [vmem:[%s247 + $0x68] sm:$0xff] %v1539
        %1572 = vst [vmem:[%s247 + $0x70] sm:$0xff] %v1540
        %1573 = vst [vmem:[%s247 + $0x78] sm:$0xff] %v1541
        %1574 = vst [vmem:[%s247 + $0x80] sm:$0xff] %v1542
        %1575 = vst [vmem:[%s247 + $0x88] sm:$0xff] %v1543
        %1576 = vst [vmem:[%s247 + $0x90] sm:$0xff] %v1544
        %1577 = vst [vmem:[%s247 + $0x98] sm:$0xff] %v1545
        %1578 = vst [vmem:[%s247 + $0xa0] sm:$0xff] %v1546
        %1579 = vst [vmem:[%s247 + $0xa8] sm:$0xff] %v1547
        %1580 = vst [vmem:[%s247 + $0xb0] sm:$0xff] %v1548
        %1581 = vst [vmem:[%s247 + $0xb8] sm:$0xff] %v1549
        %1582 = vst [vmem:[%s247 + $0xc0] sm:$0xff] %v1550
        %1583 = vst [vmem:[%s247 + $0xc8] sm:$0xff] %v1551
        %1584 = vst [vmem:[%s247 + $0xd0] sm:$0xff] %v1552
        %1585 = vst [vmem:[%s247 + $0xd8] sm:$0xff] %v1553
        %1586 = vst [vmem:[%s247 + $0xe0] sm:$0xff] %v1554
        %1587 = vst [vmem:[%s247 + $0xe8] sm:$0xff] %v1555
        %1588 = vst [vmem:[%s247 + $0xf0] sm:$0xff] %v1556
        %1589 = vst [vmem:[%s247 + $0xf8] sm:$0xff] %v1557
        %s1590 = sand.u32 %s143, 1
        %s1591 = scalar_lea.sflag [#allocation3], %s1590
        %s1592 = sand.u32 %s143, 1
        %s1593 = smul.addr %s1592, 256
        %s1594 = scalar_lea.vmem [#allocation2], %s1593
        // Predicated region
        $region37: #{tpu_custom_call.1} parent=35 // pred_check
          %p1595 = pneg %p153
        $region38: #{tpu_custom_call.1} parent=35 // pred_check_branch
          %1597 = sbr.rel (%p1595) target = $region40
        $region39: #{tpu_custom_call.1} parent=35 // pred_region
          %s1598 = smul.u32 32, %s22
          %s1600 = ssub.s32 4096, 4096
          %1601 = vsyncadd %s1591, %s1600
          %s1602 = smul.addr %s23, 32
          %s1603 = sadd.s32 %s1598, %s1602
          %s1604 = smul.addr %s1603, 128
          %s1605 = scalar_lea.hbm %s4, %s1604
          %s1606 = sshll.u32 %s1594, 4
          %s1607 = int_to_ptr.vmem [resolvable:$true] %s1606
          %1612 = dma.vmem_to_hbm [thread:$0]  %s1607, 4096, %s1605, %s1591, 128, 128, 8
        $region40: #{tpu_custom_call.1} parent=35 // pred_fallthru
          _
      $region36: #{tpu_custom_call.1} parent=5 // pred_fallthru
        _
      %p1613 = scmp.le.s32.totalorder 2, %s13
      // Predicated region
      $region41: #{tpu_custom_call.1} parent=5 // pred_check
        %p1614 = pneg %p1613
      $region42: #{tpu_custom_call.1} parent=5 // pred_check_branch
        %1616 = sbr.rel (%p1614) target = $region44
      $region43: #{tpu_custom_call.1} parent=5 // pred_region
        %s1617 = ssub.s32 %s13, 2
        // Predicated region
        $region45: #{tpu_custom_call.1} parent=43 // pred_check
          %p1618 = pneg %p159
        $region46: #{tpu_custom_call.1} parent=43 // pred_check_branch
          %1620 = sbr.rel (%p1618) target = $region48
        $region47: #{tpu_custom_call.1} parent=43 // pred_region
          %s1621 = sand.u32 %s144, 1
          %s1622 = scalar_lea.sflag [#allocation3], %s1621
          %s1623 = sand.u32 %s144, 1
          %s1624 = smul.addr %s1623, 256
          %s1625 = scalar_lea.vmem [#allocation2], %s1624
          %1626 = dma.done %s1622, 4096
        $region48: #{tpu_custom_call.1} parent=43 // pred_fallthru
          _
      $region44: #{tpu_custom_call.1} parent=5 // pred_fallthru
        _
    $region6: #{tpu_custom_call.1} parent=1 // loop_footer
      %s17 = sadd.s32 1, %s13
    $region7: #{tpu_custom_call.1} parent=1 // loop_footer_branch
      %12 = sbr.rel target = $region3
    $region8: #{tpu_custom_call.1} parent=1 // loop_exit
      _
    %1627 = vsyncpa [#allocation3], 1
    %s1628 = scalar_lea.sflag [#allocation3], 1
    %1629 = vsyncpa %s1628, 1

</llo_original>
